<compile_context>
chip_gen: v7x
topology: tpu7x:2x2x1
jax: 0.10.0
libtpu: 0.0.40
codegen_flags: <defaults>
</compile_context>

<pallas_src>
import jax
import jax.numpy as jnp
from jax.experimental import pallas as pl
from jax.experimental.pallas import tpu as pltpu


def _make_kernel(K, TH, Wo, C1, TN, resident_w, apply_act):
    """K, TH, Wo, C1 are the *effective* (stride-1 / space-to-depth) values."""
    KKC1 = K * K * C1

    def kernel(x_ref, w_ref, b_ref, o_ref, patch_ref):
        # x_ref:     (1, Hin, Win, C1)  full (padded / s2d) image of one batch
        #                               element; block index depends only on n
        # w_ref:     resident: (CB, KKC1, TN) whole flattened weight (DMA once)
        #            streamed: (1, KKC1, TN)  current C2 block
        # b_ref:     (CB, 1, TN) / (1, 1, TN) folded BN bias (f32)
        # o_ref:     (1, TH, Wo, TN)
        # patch_ref: (TH*Wo, KKC1) VMEM scratch — im2col cache across the C2 axis
        hb = pl.program_id(1)
        cb = pl.program_id(2)

        # Rebuild the im2col patch only when the (n, row-block) tile changes.
        # The C2 axis is innermost and "arbitrary", so every cb > 0 step for
        # this tile runs on the same core right after cb == 0 and reuses it.
        @pl.when(cb == 0)
        def _():
            r0 = hb * TH
            cols = []
            for kh in range(K):
                for kw in range(K):
                    cols.append(x_ref[0, pl.ds(r0 + kh, TH), kw:kw + Wo, :])
            patch_ref[...] = jnp.concatenate(cols, axis=-1).reshape(TH * Wo, KKC1)

        if resident_w:
            wblk = w_ref[cb]          # (KKC1, TN) — dynamic first-axis index
            bblk = b_ref[cb]          # (1, TN)
        else:
            wblk = w_ref[0]
            bblk = b_ref[0]

        # Single deep MXU matmul per tile; f32 accumulation, native operands.
        acc = jnp.dot(patch_ref[...], wblk, preferred_element_type=jnp.float32)
        y = acc + bblk

        if apply_act:
            # Mish(y) = y * tanh(softplus(y)).  With u = e^y:
            #   tanh(log1p(u)) = ((1+u)^2 - 1) / ((1+u)^2 + 1)
            u = jnp.exp(jnp.minimum(y, 20.0))
            t = (1.0 + u) * (1.0 + u)
            den = t + 1.0
            r = pl.reciprocal(den, approx=True)
            r = r * (2.0 - den * r)          # one Newton step -> ~exact f32
            mish = y * (t - 1.0) * r
            y = jnp.where(y > 20.0, y, mish)  # passthrough for large y

        o_ref[...] = y.reshape(1, TH, Wo, TN).astype(o_ref.dtype)

    return kernel


def conv_bn_mish(x_nchw, w_oihw, gamma, beta, rmean, rvar,
                 stride=1, groups=1, eps=1e-5, act=True, mxu_dtype=None):
    """Forward of Conv(c1, c2, k, s, act=True) with eval-mode BatchNorm."""
    assert groups == 1  # TODO(synk): grouped conv (g > 1) not implemented
    N, C1, H, W = x_nchw.shape
    C2, _, K, _ = w_oihw.shape
    p = K // 2                                    # autopad (odd k)
    Ho = (H + 2 * p - K) // stride + 1
    Wo = (W + 2 * p - K) // stride + 1
    Hp, Wp = H + 2 * p, W + 2 * p

    cdtype = jnp.dtype(mxu_dtype) if mxu_dtype is not None else jnp.dtype(x_nchw.dtype)
    out_dtype = jnp.dtype(x_nchw.dtype)

    # ---- layout conversion + halo padding (wrapper glue) --------------------
    # TODO(synk): on a real network hot path keep activations NHWC end-to-end
    # and fold the halo pad / channel slice into neighbouring ops; here the
    # NCHW interface of the original PyTorch module is preserved.
    x = jnp.transpose(x_nchw, (0, 2, 3, 1))                   # NHWC
    x = jnp.pad(x, ((0, 0), (p, p), (p, p), (0, 0)))

    # ---- fold eval-mode BN scale into the weights; keep only the bias -------
    inv_std = 1.0 / jnp.sqrt(rvar.astype(jnp.float32) + eps)
    scale = gamma.astype(jnp.float32) * inv_std               # (C2,)
    bias = beta.astype(jnp.float32) - rmean.astype(jnp.float32) * scale

    # Pad C2 to a multiple of 128 -> lane-dense output stores + C2 tiling.
    C2p = ((C2 + 127) // 128) * 128
    # TODO(synk): sweep TN per generation (v5e prefers 128; v6e/v7x 256).
    TN = 256 if C2p % 256 == 0 else 128
    CB = C2p // TN

    w_hwio = jnp.transpose(w_oihw, (2, 3, 1, 0)).astype(jnp.float32)   # HWIO
    w_hwio = w_hwio * scale[None, None, None, :]
    w_hwio = jnp.pad(w_hwio, ((0, 0), (0, 0), (0, 0), (0, C2p - C2)))
    bias_p = jnp.pad(bias, (0, C2p - C2))

    # ---- stride > 1: wrapper-side space-to-depth -> kernel always s == 1 ----
    if stride > 1:
        s = stride
        Ke = -(-K // s)                               # ceil(K / s)
        Hq = max(-(-Hp // s), Ho + Ke - 1)
        Wq = max(-(-Wp // s), Wo + Ke - 1)
        x = jnp.pad(x, ((0, 0), (0, Hq * s - Hp), (0, Wq * s - Wp), (0, 0)))
        x = x.reshape(N, Hq, s, Wq, s, C1).transpose(0, 1, 3, 2, 4, 5)
        x = x.reshape(N, Hq, Wq, s * s * C1)
        wq = jnp.zeros((Ke, Ke, s, s, C1, C2p), jnp.float32)
        for kh in range(K):
            for kw in range(K):
                wq = wq.at[kh // s, kw // s, kh % s, kw % s].set(w_hwio[kh, kw])
        w_hwio = wq.reshape(Ke, Ke, s * s * C1, C2p)
        C1e, Hin, Win = s * s * C1, Hq, Wq
    else:
        Ke, C1e, Hin, Win = K, C1, Hp, Wp

    KKC1 = Ke * Ke * C1e
    # TODO(synk): for very small C1 (stem layers) the per-tile tap concat could
    # be moved to the wrapper (pre-packed im2col channels) to avoid lane
    # rotates; kept in-kernel here for generality.
    x = x.astype(cdtype)
    w3d = w_hwio.reshape(KKC1, CB, TN).transpose(1, 0, 2).astype(cdtype)
    b3d = bias_p.reshape(CB, 1, TN)                           # f32 bias

    it = jnp.dtype(cdtype).itemsize
    out_it = jnp.dtype(out_dtype).itemsize

    # Weight residency: keep the whole flattened weight in VMEM (DMA'd once)
    # unless it is unusually large, in which case stream (KKC1, TN) blocks.
    w_bytes = KKC1 * C2p * it
    resident_w = w_bytes <= 16 * 1024 * 1024

    # ---- row-tile selection --------------------------------------------------
    # Largest divisor TH of Ho with bounded matmul M-dim and im2col patch.
    TH = 1
    for th in range(1, Ho + 1):
        if Ho % th:
            continue
        if th * Wo <= 1024 and th * Wo * KKC1 * it <= 4 * 1024 * 1024:
            TH = th
    # v7x megacore: if N == 1 make sure a "parallel" grid axis has >= 2 steps.
    if N == 1 and TH == Ho and Ho > 1:
        for th in range(Ho // 2, 0, -1):
            if Ho % th == 0:
                TH = th
                break
    HB = Ho // TH

    # ---- VMEM budget (from actual buffer sizes, clamped to the chip) --------
    try:
        vmem_ceiling = int(pltpu.get_tpu_info().vmem_capacity_bytes) * 3 // 4
    except Exception:
        vmem_ceiling = 48 * 1024 * 1024               # safe on v5e/v6e/v7x
    w_buf = w_bytes if resident_w else 2 * KKC1 * TN * it
    vmem_needed = (2 * Hin * Win * C1e * it           # input image (dbl-buffered)
                   + 2 * w_buf                        # weights
                   + 2 * TH * Wo * TN * out_it        # output tile (dbl-buffered)
                   + 3 * TH * Wo * KKC1 * it          # patch scratch + temps
                   + 4 * TH * Wo * TN                 # f32 accumulator temp
                   + 4 * CB * TN * 4)                 # bias
    vmem_limit = int(min(max(3 * vmem_needed // 2, 32 * 1024 * 1024), vmem_ceiling))
    # TODO(synk): for very large H*W*C1 on v7x (64 MiB VMEM) the full-image
    # input block should be replaced by halo row tiles (pl.ANY + manual DMA).

    kernel = _make_kernel(Ke, TH, Wo, C1e, TN, resident_w, act)

    if resident_w:
        w_spec = pl.BlockSpec((CB, KKC1, TN), lambda n, h, c: (0, 0, 0))
        b_spec = pl.BlockSpec((CB, 1, TN), lambda n, h, c: (0, 0, 0))
    else:
        w_spec = pl.BlockSpec((1, KKC1, TN), lambda n, h, c: (c, 0, 0))
        b_spec = pl.BlockSpec((1, 1, TN), lambda n, h, c: (c, 0, 0))

    cost = pl.CostEstimate(
        flops=2 * N * Ho * Wo * C2 * K * K * C1,
        transcendentals=(N * Ho * Wo * C2) if act else 0,
        bytes_accessed=int(N * C1 * H * W * it + KKC1 * C2p * it
                           + N * Ho * Wo * C2p * out_it))

    out_nhwc = pl.pallas_call(
        kernel,
        out_shape=jax.ShapeDtypeStruct((N, Ho, Wo, C2p), out_dtype),
        grid=(N, HB, CB),
        in_specs=[
            # Full (padded / s2d) image per batch element; block index depends
            # only on n -> fetched once per n, reused across the row/C2 axes.
            pl.BlockSpec((1, Hin, Win, C1e), lambda n, h, c: (n, 0, 0, 0)),
            w_spec,
            b_spec,
        ],
        out_specs=pl.BlockSpec((1, TH, Wo, TN), lambda n, h, c: (n, h, 0, c)),
        scratch_shapes=[pltpu.VMEM((TH * Wo, KKC1), cdtype)],
        compiler_params=pltpu.CompilerParams(
            dimension_semantics=("parallel", "parallel", "arbitrary"),
            vmem_limit_bytes=vmem_limit),
        cost_estimate=cost,
    )(x, w3d, b3d)

    out_nhwc = out_nhwc[..., :C2]
    return jnp.transpose(out_nhwc, (0, 3, 1, 2))              # back to NCHW


def _reference(x_nchw, w_oihw, gamma, beta, rmean, rvar, stride=1, eps=1e-5):
    """Pure-JAX reference (lax conv + eval BN + Mish) for verification."""
    K = w_oihw.shape[2]
    p = K // 2
    y = jax.lax.conv_general_dilated(
        x_nchw.astype(jnp.float32), w_oihw.astype(jnp.float32),
        window_strides=(stride, stride), padding=((p, p), (p, p)),
        dimension_numbers=("NCHW", "OIHW", "NCHW"))
    inv_std = 1.0 / jnp.sqrt(rvar + eps)
    y = (y - rmean[None, :, None, None]) * inv_std[None, :, None, None]
    y = y * gamma[None, :, None, None] + beta[None, :, None, None]
    sp = jnp.where(y > 20.0, y, jnp.log1p(jnp.exp(jnp.minimum(y, 20.0))))
    return y * jnp.tanh(sp)


if __name__ == "__main__":
    key = jax.random.PRNGKey(0)

    def make_case(k, N, C1, H, W, C2, K):
        kx, kw, kg, kb, km, kv = jax.random.split(k, 6)
        x = jax.random.normal(kx, (N, C1, H, W), dtype=jnp.float32)
        w = jax.random.normal(kw, (C2, C1, K, K), dtype=jnp.float32) * 0.1
        gamma = 1.0 + 0.1 * jax.random.normal(kg, (C2,), dtype=jnp.float32)
        beta = 0.1 * jax.random.normal(kb, (C2,), dtype=jnp.float32)
        rmean = 0.05 * jax.random.normal(km, (C2,), dtype=jnp.float32)
        rvar = 1.0 + 0.1 * jax.random.uniform(kv, (C2,), dtype=jnp.float32)
        return x, w, gamma, beta, rmean, rvar

    k1, k2, k3 = jax.random.split(key, 3)

    # Case 1: Conv(c1=4, c2=8, k=3, s=1) — baseline, f32 operands.
    x, w, g, b, m, v = make_case(k1, 2, 4, 16, 16, 8, 3)
    out = jax.block_until_ready(conv_bn_mish(x, w, g, b, m, v, stride=1))
    ref = _reference(x, w, g, b, m, v, stride=1)
    assert out.shape == (2, 8, 16, 16)
    assert jnp.allclose(out, ref, atol=5e-4, rtol=5e-4), \
        f"case1 max err {jnp.max(jnp.abs(out - ref))}"

    # Case 2: stride=2 downsampling conv (space-to-depth path), N=1.
    x, w, g, b, m, v = make_case(k2, 1, 3, 16, 16, 8, 3)
    out = jax.block_until_ready(conv_bn_mish(x, w, g, b, m, v, stride=2))
    ref = _reference(x, w, g, b, m, v, stride=2)
    assert out.shape == (1, 8, 8, 8)
    assert jnp.allclose(out, ref, atol=5e-4, rtol=5e-4), \
        f"case2 max err {jnp.max(jnp.abs(out - ref))}"

    # Case 3: C2 > 128 (multiple C2 blocks -> exercises the cached im2col
    # patch and dynamic weight-block indexing) with bf16 MXU operands.
    x, w, g, b, m, v = make_case(k3, 1, 4, 16, 16, 384, 3)
    out = jax.block_until_ready(
        conv_bn_mish(x, w, g, b, m, v, stride=1, mxu_dtype=jnp.bfloat16))
    ref = _reference(x, w, g, b, m, v, stride=1)
    assert out.shape == (1, 384, 16, 16)
    assert jnp.allclose(out, ref, atol=5e-2, rtol=5e-2), \
        f"case3 max err {jnp.max(jnp.abs(out - ref))}"

    print("KERNEL_OK")
</pallas_src>

<mosaic_0001>
module attributes {stable_mosaic.version = 11 : i64} {
  func.func @kernel(%arg0: i32, %arg1: i32, %arg2: i32, %arg3: memref<1x18x18x4xf32, #tpu.memory_space<vmem>>, %arg4: memref<1x36x128xf32, #tpu.memory_space<vmem>>, %arg5: memref<1x1x128xf32, #tpu.memory_space<vmem>>, %arg6: memref<1x16x16x128xf32, #tpu.memory_space<vmem>>, %arg7: memref<256x36xf32, #tpu.memory_space<vmem>>) attributes {dimension_semantics = [#tpu.dimension_semantics<parallel>, #tpu.dimension_semantics<parallel>, #tpu.dimension_semantics<arbitrary>], iteration_bounds = array<i64: 2, 1, 1>, scalar_prefetch = 0 : i64, scratch_operands = 1 : i64, tpu.core_type = #tpu.core_type<tc>, window_params = [{transform_indices = @transform_0, window_bounds = array<i64: 1, 18, 18, 4>}, {pipeline_mode = #tpu.pipeline_mode<synchronous>, transform_indices = @transform_1, window_bounds = array<i64: 1, 36, 128>}, {pipeline_mode = #tpu.pipeline_mode<synchronous>, transform_indices = @transform_2, window_bounds = array<i64: 1, 1, 128>}, {transform_indices = @transform_3, window_bounds = array<i64: 1, 16, 16, 128>}]} {
    %c0_i32 = arith.constant 0 : i32
    %0 = arith.cmpi eq, %arg2, %c0_i32 : i32
    %1 = arith.extui %0 : i1 to i32
    %c0_i32_0 = arith.constant 0 : i32
    %2 = arith.cmpi ne, %1, %c0_i32_0 : i32
    scf.if %2 {
      %c16_i32 = arith.constant 16 : i32
      %37 = arith.muli %arg1, %c16_i32 : i32
      %c0_i32_17 = arith.constant 0 : i32
      %38 = arith.addi %37, %c0_i32_17 : i32
      %c0_18 = arith.constant 0 : index
      %39 = arith.index_cast %38 : i32 to index
      %c0_19 = arith.constant 0 : index
      %c0_20 = arith.constant 0 : index
      %40 = vector.load %arg3[%c0_18, %39, %c0_19, %c0_20] : memref<1x18x18x4xf32, #tpu.memory_space<vmem>>, vector<1x16x16x4xf32>
      %41 = vector.shape_cast %40 : vector<1x16x16x4xf32> to vector<16x16x4xf32>
      %c0_i32_21 = arith.constant 0 : i32
      %42 = arith.addi %37, %c0_i32_21 : i32
      %c0_22 = arith.constant 0 : index
      %43 = arith.index_cast %42 : i32 to index
      %c1 = arith.constant 1 : index
      %c0_23 = arith.constant 0 : index
      %44 = vector.load %arg3[%c0_22, %43, %c1, %c0_23] : memref<1x18x18x4xf32, #tpu.memory_space<vmem>>, vector<1x16x16x4xf32>
      %45 = vector.shape_cast %44 : vector<1x16x16x4xf32> to vector<16x16x4xf32>
      %c0_i32_24 = arith.constant 0 : i32
      %46 = arith.addi %37, %c0_i32_24 : i32
      %c0_25 = arith.constant 0 : index
      %47 = arith.index_cast %46 : i32 to index
      %c2 = arith.constant 2 : index
      %c0_26 = arith.constant 0 : index
      %48 = vector.load %arg3[%c0_25, %47, %c2, %c0_26] : memref<1x18x18x4xf32, #tpu.memory_space<vmem>>, vector<1x16x16x4xf32>
      %49 = vector.shape_cast %48 : vector<1x16x16x4xf32> to vector<16x16x4xf32>
      %c1_i32 = arith.constant 1 : i32
      %50 = arith.addi %37, %c1_i32 : i32
      %c0_27 = arith.constant 0 : index
      %51 = arith.index_cast %50 : i32 to index
      %c0_28 = arith.constant 0 : index
      %c0_29 = arith.constant 0 : index
      %52 = vector.load %arg3[%c0_27, %51, %c0_28, %c0_29] : memref<1x18x18x4xf32, #tpu.memory_space<vmem>>, vector<1x16x16x4xf32>
      %53 = vector.shape_cast %52 : vector<1x16x16x4xf32> to vector<16x16x4xf32>
      %c1_i32_30 = arith.constant 1 : i32
      %54 = arith.addi %37, %c1_i32_30 : i32
      %c0_31 = arith.constant 0 : index
      %55 = arith.index_cast %54 : i32 to index
      %c1_32 = arith.constant 1 : index
      %c0_33 = arith.constant 0 : index
      %56 = vector.load %arg3[%c0_31, %55, %c1_32, %c0_33] : memref<1x18x18x4xf32, #tpu.memory_space<vmem>>, vector<1x16x16x4xf32>
      %57 = vector.shape_cast %56 : vector<1x16x16x4xf32> to vector<16x16x4xf32>
      %c1_i32_34 = arith.constant 1 : i32
      %58 = arith.addi %37, %c1_i32_34 : i32
      %c0_35 = arith.constant 0 : index
      %59 = arith.index_cast %58 : i32 to index
      %c2_36 = arith.constant 2 : index
      %c0_37 = arith.constant 0 : index
      %60 = vector.load %arg3[%c0_35, %59, %c2_36, %c0_37] : memref<1x18x18x4xf32, #tpu.memory_space<vmem>>, vector<1x16x16x4xf32>
      %61 = vector.shape_cast %60 : vector<1x16x16x4xf32> to vector<16x16x4xf32>
      %c2_i32 = arith.constant 2 : i32
      %62 = arith.addi %37, %c2_i32 : i32
      %c0_38 = arith.constant 0 : index
      %63 = arith.index_cast %62 : i32 to index
      %c0_39 = arith.constant 0 : index
      %c0_40 = arith.constant 0 : index
      %64 = vector.load %arg3[%c0_38, %63, %c0_39, %c0_40] : memref<1x18x18x4xf32, #tpu.memory_space<vmem>>, vector<1x16x16x4xf32>
      %65 = vector.shape_cast %64 : vector<1x16x16x4xf32> to vector<16x16x4xf32>
      %c2_i32_41 = arith.constant 2 : i32
      %66 = arith.addi %37, %c2_i32_41 : i32
      %c0_42 = arith.constant 0 : index
      %67 = arith.index_cast %66 : i32 to index
      %c1_43 = arith.constant 1 : index
      %c0_44 = arith.constant 0 : index
      %68 = vector.load %arg3[%c0_42, %67, %c1_43, %c0_44] : memref<1x18x18x4xf32, #tpu.memory_space<vmem>>, vector<1x16x16x4xf32>
      %69 = vector.shape_cast %68 : vector<1x16x16x4xf32> to vector<16x16x4xf32>
      %c2_i32_45 = arith.constant 2 : i32
      %70 = arith.addi %37, %c2_i32_45 : i32
      %c0_46 = arith.constant 0 : index
      %71 = arith.index_cast %70 : i32 to index
      %c2_47 = arith.constant 2 : index
      %c0_48 = arith.constant 0 : index
      %72 = vector.load %arg3[%c0_46, %71, %c2_47, %c0_48] : memref<1x18x18x4xf32, #tpu.memory_space<vmem>>, vector<1x16x16x4xf32>
      %73 = vector.shape_cast %72 : vector<1x16x16x4xf32> to vector<16x16x4xf32>
      %74 = tpu.concatenate %41, %45, %49, %53, %57, %61, %65, %69, %73 in 2 : vector<16x16x4xf32>, vector<16x16x4xf32>, vector<16x16x4xf32>, vector<16x16x4xf32>, vector<16x16x4xf32>, vector<16x16x4xf32>, vector<16x16x4xf32>, vector<16x16x4xf32>, vector<16x16x4xf32> -> vector<16x16x36xf32>
      %75 = vector.shape_cast %74 : vector<16x16x36xf32> to vector<256x36xf32>
      %c0_49 = arith.constant 0 : index
      %c0_50 = arith.constant 0 : index
      %76 = vector.load %arg7[%c0_49, %c0_50] : memref<256x36xf32, #tpu.memory_space<vmem>>, vector<256x36xf32>
      tpu.vector_store %arg7[%c0_49, %c0_50], %75 {strides = array<i32>} : memref<256x36xf32, #tpu.memory_space<vmem>>, vector<256x36xf32>,
    } else {
    }
    %3 = arith.index_cast %arg2 : i32 to index
    %c0 = arith.constant 0 : index
    %c0_1 = arith.constant 0 : index
    %4 = vector.load %arg4[%3, %c0, %c0_1] : memref<1x36x128xf32, #tpu.memory_space<vmem>>, vector<1x36x128xf32>
    %5 = vector.shape_cast %4 : vector<1x36x128xf32> to vector<36x128xf32>
    %6 = arith.index_cast %arg2 : i32 to index
    %c0_2 = arith.constant 0 : index
    %c0_3 = arith.constant 0 : index
    %7 = vector.load %arg5[%6, %c0_2, %c0_3] : memref<1x1x128xf32, #tpu.memory_space<vmem>>, vector<1x1x128xf32>
    %8 = vector.shape_cast %7 : vector<1x1x128xf32> to vector<1x128xf32>
    %c0_4 = arith.constant 0 : index
    %c0_5 = arith.constant 0 : index
    %9 = vector.load %arg7[%c0_4, %c0_5] : memref<256x36xf32, #tpu.memory_space<vmem>>, vector<256x36xf32>
    %cst = arith.constant dense<0.000000e+00> : vector<256x128xf32>
    %10 = tpu.matmul %9, %5, %cst {dimension_numbers = #tpu.dot_dimension_numbers<[1], [0], [0], [1], [0, 0, 1, 1], [], []>} : vector<256x36xf32>, vector<36x128xf32>, vector<256x128xf32> -> vector<256x128xf32>
    %11 = vector.broadcast %8 : vector<1x128xf32> to vector<256x128xf32>
    %12 = arith.addf %10, %11 : vector<256x128xf32>
    %cst_6 = arith.constant 2.000000e+01 : f32
    %13 = vector.broadcast %cst_6 : f32 to vector<256x128xf32>
    %14 = arith.minimumf %12, %13 : vector<256x128xf32>
    %15 = math.exp %14 : vector<256x128xf32>
    %cst_7 = arith.constant 1.000000e+00 : f32
    %16 = vector.broadcast %cst_7 : f32 to vector<256x128xf32>
    %17 = arith.addf %16, %15 : vector<256x128xf32>
    %cst_8 = arith.constant 1.000000e+00 : f32
    %18 = vector.broadcast %cst_8 : f32 to vector<256x128xf32>
    %19 = arith.addf %18, %15 : vector<256x128xf32>
    %20 = arith.mulf %17, %19 : vector<256x128xf32>
    %cst_9 = arith.constant 1.000000e+00 : f32
    %21 = vector.broadcast %cst_9 : f32 to vector<256x128xf32>
    %22 = arith.addf %20, %21 : vector<256x128xf32>
    %23 = tpu.reciprocal %22 {approx = true} : vector<256x128xf32> -> vector<256x128xf32>
    %24 = arith.mulf %22, %23 : vector<256x128xf32>
    %cst_10 = arith.constant 2.000000e+00 : f32
    %25 = vector.broadcast %cst_10 : f32 to vector<256x128xf32>
    %26 = arith.subf %25, %24 : vector<256x128xf32>
    %27 = arith.mulf %23, %26 : vector<256x128xf32>
    %cst_11 = arith.constant 1.000000e+00 : f32
    %28 = vector.broadcast %cst_11 : f32 to vector<256x128xf32>
    %29 = arith.subf %20, %28 : vector<256x128xf32>
    %30 = arith.mulf %12, %29 : vector<256x128xf32>
    %31 = arith.mulf %30, %27 : vector<256x128xf32>
    %cst_12 = arith.constant 2.000000e+01 : f32
    %32 = vector.broadcast %cst_12 : f32 to vector<256x128xf32>
    %33 = arith.cmpf ogt, %12, %32 : vector<256x128xf32>
    %34 = arith.select %33, %12, %31 : vector<256x128xi1>, vector<256x128xf32>
    %35 = vector.shape_cast %34 : vector<256x128xf32> to vector<1x16x16x128xf32>
    %c0_13 = arith.constant 0 : index
    %c0_14 = arith.constant 0 : index
    %c0_15 = arith.constant 0 : index
    %c0_16 = arith.constant 0 : index
    %36 = vector.load %arg6[%c0_13, %c0_14, %c0_15, %c0_16] : memref<1x16x16x128xf32, #tpu.memory_space<vmem>>, vector<1x16x16x128xf32>
    tpu.vector_store %arg6[%c0_13, %c0_14, %c0_15, %c0_16], %35 {strides = array<i32>} : memref<1x16x16x128xf32, #tpu.memory_space<vmem>>, vector<1x16x16x128xf32>,
    return
  }
  func.func @transform_0(%arg0: i32, %arg1: i32, %arg2: i32) -> (i32, i32, i32, i32) {
    %c0_i32 = arith.constant 0 : i32
    %c0_i32_0 = arith.constant 0 : i32
    %c0_i32_1 = arith.constant 0 : i32
    %c0_i32_2 = arith.constant 0 : i32
    return %arg0, %c0_i32, %c0_i32_0, %c0_i32_1 : i32, i32, i32, i32
  }
  func.func @transform_1(%arg0: i32, %arg1: i32, %arg2: i32) -> (i32, i32, i32) {
    %c0_i32 = arith.constant 0 : i32
    %c0_i32_0 = arith.constant 0 : i32
    %c0_i32_1 = arith.constant 0 : i32
    %c0_i32_2 = arith.constant 0 : i32
    return %c0_i32, %c0_i32_0, %c0_i32_1 : i32, i32, i32
  }
  func.func @transform_2(%arg0: i32, %arg1: i32, %arg2: i32) -> (i32, i32, i32) {
    %c0_i32 = arith.constant 0 : i32
    %c0_i32_0 = arith.constant 0 : i32
    %c0_i32_1 = arith.constant 0 : i32
    %c0_i32_2 = arith.constant 0 : i32
    return %c0_i32, %c0_i32_0, %c0_i32_1 : i32, i32, i32
  }
  func.func @transform_3(%arg0: i32, %arg1: i32, %arg2: i32) -> (i32, i32, i32, i32) {
    %c0_i32 = arith.constant 0 : i32
    %c0_i32_0 = arith.constant 0 : i32
    return %arg0, %arg1, %c0_i32, %arg2 : i32, i32, i32, i32
  }
}

</mosaic_0001>

<llo_original>
// kernel: tpu_custom_call.1
$region0: #{tpu_custom_call.1}
  #allocation0 [shape = 'u32[]', space=smem, size = 0x4, offset = 0x4, fixed_abs, tag = 'smem constant byte address 0x4 - core index']
  #allocation1 [shape = 'u32[144,128]{1,0:T(1,128)}', space=vmem, size = 0x12000, scoped, tag = 'internal scratch']
  #allocation2 [shape = 'f32[256,36]{1,0:T(8,128)}', space=vmem, size = 0x20000, scoped, tag = 'scratch operand']
  %s0 = inlined_call_operand.vmem [shape: f32[2,18,18,4], index: 0, kind: input, shape index: {}]
  %s1 = inlined_call_operand.vmem [shape: f32[1,36,128], index: 1, kind: input, shape index: {}]
  %s2 = inlined_call_operand.vmem [shape: f32[1,1,128], index: 2, kind: input, shape index: {}]
  %s3 = inlined_call_operand.hbm [shape: f32[2,16,16,128], index: 3, kind: output, shape index: {}]
  %s4 = sld [smem:[#allocation0]]
  $region49: #{tpu_custom_call.1} parent=0
    _
  %s6 = ssub.s32 1, %s4
  %s7 = scalar_select 0, %s6, %s4
  $region1: #{tpu_custom_call.1} parent=0
    #allocation3 [shape = 'u8[262144]{0}', space=vmem, size = 0x40000, scoped, tag = 'output window, operand 0']
    #allocation4 [shape = 's32[2]{0}', space=sflag, size = 0x8, scoped, tag = 'scoped memory for tpu_custom_call.1']
    %8 = vsyncpa [#allocation4], 0
    %s9 = scalar_lea.sflag [#allocation4], 1
    %10 = vsyncpa %s9, 0
    loop: start=0, step=1, limit=4
    $region2: #{tpu_custom_call.1} parent=1 // loop_pre_header
      _
    $region3: #{tpu_custom_call.1} parent=1 // loop_header
      %s12 = sphi 0, %s16
      %p13 = scmp.ge.s32.totalorder %s12, 4
      %s19 = sphi 0, %s38
      %s20 = sphi 0, %s34
      %s21 = sphi 0, %s30
      %s22 = sphi 0, %s19
      %s23 = sphi 0, %s20
      %s24 = sphi 0, %s21
      %s25 = sphi 0, %s22
      %s26 = sphi 0, %s23
      %s27 = sphi 0, %s24
      %s41 = sphi 0, %s43
      %s44 = sphi 0, %s41
      %s45 = sphi 0, %s44
      %s61 = sphi 0, %s45
      %s65 = sphi 0, %s65
      %s67 = sphi 0, %s65
      %s68 = sphi 0, %s67
      %s82 = sphi 0, %s68
      %s86 = sphi 0, %s86
      %s88 = sphi 0, %s86
      %s89 = sphi 0, %s88
      %s103 = sphi 0, %s89
      %s113 = sphi 0, %s115
      %s116 = sphi 0, %s113
      %s117 = sphi 0, %s116
      %s133 = sphi 0, %s117
    $region4: #{tpu_custom_call.1} parent=1 // loop_header_branch
      %15 = sbr.rel (%p13) target = $region8
    $region5: #{tpu_custom_call.1} parent=1 // loop_body
      %s17 = ssub.s32 %s12, 1
      %s18 = ssub.s32 %s12, 2
      %s28 = sadd.s32 1, %s21
      %p29 = scmp.ge.s32.totalorder %s28, 1
      %s30 = scalar_select %p29, 0, %s28
      %s31 = sadd.s32 1, %s20
      %s32 = scalar_select %p29, %s31, %s20
      %p33 = scmp.ge.s32.totalorder %s32, 1
      %s34 = scalar_select %p33, 0, %s32
      %s35 = sadd.s32 1, %s19
      %s36 = scalar_select %p33, %s35, %s19
      %p37 = scmp.ge.s32.totalorder %s36, 2
      %s38 = scalar_select %p37, 0, %s36
      %s39 = ssub.s32 %s19, %s38
      %p40 = scmp.eq.s32.totalorder %s39, 0
      %s42 = sadd.s32 %s41, 1
      %s43 = scalar_select %p40, %s41, %s42
      %p46 = pneg %p40
      %p47 = scmp.eq.s32.totalorder %s12, 1
      %p48 = por %p46, %p47
      %p49 = scmp.ne.s32.totalorder %s41, %s44
      %p50 = scmp.eq.s32.totalorder %s12, 0
      %p51 = por %p49, %p50
      %p52 = scmp.ne.s32.totalorder %s41, %s44
      %p53 = scmp.eq.s32.totalorder %s17, 1
      %p54 = por %p52, %p53
      %p55 = scmp.ne.s32.totalorder %s44, %s45
      %p56 = scmp.eq.s32.totalorder %s17, 0
      %p57 = por %p55, %p56
      %p58 = scmp.ne.s32.totalorder %s44, %s45
      %p59 = scmp.eq.s32.totalorder %s18, 1
      %p60 = por %p58, %p59
      %p62 = scmp.ne.s32.totalorder %s45, %s61
      %p63 = scmp.eq.s32.totalorder %s18, 0
      %p64 = por %p62, %p63
      %s66 = sadd.s32 %s65, 1
      %p69 = scmp.eq.s32.totalorder %s12, 1
      %p70 = scmp.ne.s32.totalorder %s65, %s67
      %p71 = scmp.eq.s32.totalorder %s12, 0
      %p72 = por %p70, %p71
      %p73 = scmp.ne.s32.totalorder %s65, %s67
      %p74 = scmp.eq.s32.totalorder %s17, 1
      %p75 = por %p73, %p74
      %p76 = scmp.ne.s32.totalorder %s67, %s68
      %p77 = scmp.eq.s32.totalorder %s17, 0
      %p78 = por %p76, %p77
      %p79 = scmp.ne.s32.totalorder %s67, %s68
      %p80 = scmp.eq.s32.totalorder %s18, 1
      %p81 = por %p79, %p80
      %p83 = scmp.ne.s32.totalorder %s68, %s82
      %p84 = scmp.eq.s32.totalorder %s18, 0
      %p85 = por %p83, %p84
      %s87 = sadd.s32 %s86, 1
      %p90 = scmp.eq.s32.totalorder %s12, 1
      %p91 = scmp.ne.s32.totalorder %s86, %s88
      %p92 = scmp.eq.s32.totalorder %s12, 0
      %p93 = por %p91, %p92
      %p94 = scmp.ne.s32.totalorder %s86, %s88
      %p95 = scmp.eq.s32.totalorder %s17, 1
      %p96 = por %p94, %p95
      %p97 = scmp.ne.s32.totalorder %s88, %s89
      %p98 = scmp.eq.s32.totalorder %s17, 0
      %p99 = por %p97, %p98
      %p100 = scmp.ne.s32.totalorder %s88, %s89
      %p101 = scmp.eq.s32.totalorder %s18, 1
      %p102 = por %p100, %p101
      %p104 = scmp.ne.s32.totalorder %s89, %s103
      %p105 = scmp.eq.s32.totalorder %s18, 0
      %p106 = por %p104, %p105
      %s107 = ssub.s32 %s19, %s38
      %s108 = ssub.s32 %s20, %s34
      %s109 = sor.u32 %s107, %s108
      %s110 = ssub.s32 %s21, %s30
      %s111 = sor.u32 %s109, %s110
      %p112 = scmp.eq.s32.totalorder %s111, 0
      %s114 = sadd.s32 %s113, 1
      %s115 = scalar_select %p112, %s113, %s114
      %p118 = pneg %p112
      %p119 = scmp.eq.s32.totalorder %s12, 1
      %p120 = por %p118, %p119
      %p121 = scmp.ne.s32.totalorder %s113, %s116
      %p122 = scmp.eq.s32.totalorder %s12, 0
      %p123 = por %p121, %p122
      %p124 = scmp.ne.s32.totalorder %s113, %s116
      %p125 = scmp.eq.s32.totalorder %s17, 1
      %p126 = por %p124, %p125
      %p127 = scmp.ne.s32.totalorder %s116, %s117
      %p128 = scmp.eq.s32.totalorder %s17, 0
      %p129 = por %p127, %p128
      %p130 = scmp.ne.s32.totalorder %s116, %s117
      %p131 = scmp.eq.s32.totalorder %s18, 1
      %p132 = por %p130, %p131
      %p134 = scmp.ne.s32.totalorder %s117, %s133
      %p135 = scmp.eq.s32.totalorder %s18, 0
      %p136 = por %p134, %p135
      %p137 = scmp.le.s32.totalorder 1, %s12
      %p138 = scmp.lt.s32.totalorder %s12, 3
      %p139 = pnand %p137, %p138
      %p140 = pneg %p139
      // Predicated region
      $region9: #{tpu_custom_call.1} parent=5 // pred_check
        _
      $region10: #{tpu_custom_call.1} parent=5 // pred_check_branch
        %142 = sbr.rel (%p139) target = $region12
      $region11: #{tpu_custom_call.1} parent=5 // pred_region
        %s143 = ssub.s32 %s12, 1
        // Predicated region
        $region13: #{tpu_custom_call.1} parent=11 // pred_check
          %p144 = pneg %p78
        $region14: #{tpu_custom_call.1} parent=11 // pred_check_branch
          %146 = sbr.rel (%p144) target = $region16
        $region15: #{tpu_custom_call.1} parent=11 // pred_region
          _
        $region16: #{tpu_custom_call.1} parent=11 // pred_fallthru
          _
        // Predicated region
        $region17: #{tpu_custom_call.1} parent=11 // pred_check
          %p147 = pneg %p99
        $region18: #{tpu_custom_call.1} parent=11 // pred_check_branch
          %149 = sbr.rel (%p147) target = $region20
        $region19: #{tpu_custom_call.1} parent=11 // pred_region
          _
        $region20: #{tpu_custom_call.1} parent=11 // pred_fallthru
          _
      $region12: #{tpu_custom_call.1} parent=5 // pred_fallthru
        _
      %p150 = scmp.lt.s32.totalorder %s12, 2
      // Predicated region
      $region21: #{tpu_custom_call.1} parent=5 // pred_check
        %p151 = pneg %p150
      $region22: #{tpu_custom_call.1} parent=5 // pred_check_branch
        %153 = sbr.rel (%p151) target = $region24
      $region23: #{tpu_custom_call.1} parent=5 // pred_region
        // Predicated region
        $region25: #{tpu_custom_call.1} parent=23 // pred_check
          %p154 = pneg %p51
        $region26: #{tpu_custom_call.1} parent=23 // pred_check_branch
          %156 = sbr.rel (%p154) target = $region28
        $region27: #{tpu_custom_call.1} parent=23 // pred_region
          %p157 = scmp.lt.s32.totalorder %s19, 1
          %s158 = scalar_select %p157, %s19, 1
          %s159 = smul.addr %s158, 54
          %s160 = smul.addr %s159, 8
          %s161 = scalar_lea.vmem %s0, %s160
        $region28: #{tpu_custom_call.1} parent=23 // pred_fallthru
          _
      $region24: #{tpu_custom_call.1} parent=5 // pred_fallthru
        _
      %p162 = scmp.le.s32.totalorder 1, %s12
      %p163 = scmp.lt.s32.totalorder %s12, 3
      %p164 = pnand %p162, %p163
      %p165 = pneg %p164
      // Predicated region
      $region29: #{tpu_custom_call.1} parent=5 // pred_check
        _
      $region30: #{tpu_custom_call.1} parent=5 // pred_check_branch
        %167 = sbr.rel (%p164) target = $region32
      $region31: #{tpu_custom_call.1} parent=5 // pred_region
        %s168 = ssub.s32 %s12, 1
        %p169 = scmp.lt.s32.totalorder %s22, 1
        %s170 = scalar_select %p169, %s22, 1
        %s171 = smul.addr %s170, 54
        %s172 = smul.addr %s171, 8
        %s173 = scalar_lea.vmem %s0, %s172
        %p174 = pneg %p57
        %p175 = pneg %p54
        %p176 = pneg %p78
        %p177 = pneg %p75
        %p178 = pneg %p99
        %p179 = pneg %p96
        %p180 = pneg %p129
        %p181 = pneg %p126
        %s182 = sand.u32 %s116, 1
        %s183 = scalar_lea.sflag [#allocation4], %s182
        %s184 = sand.u32 %s116, 1
        %s185 = smul.addr %s184, 256
        %s186 = scalar_lea.vmem [#allocation3], %s185
        %p187 = scmp.lt.s32.totalorder %s22, 1
        %s188 = scalar_select %p187, %s22, 1
        %s189 = smul.addr %s188, 54
        %s190 = smul.addr %s189, 8
        %s191 = scalar_lea.vmem %s0, %s190
        %s192 = smul.u32 16, %s23
        %p193 = scmp.eq.s32.totalorder %s24, 0
        // Predicated region
        $region33: #{tpu_custom_call.1} parent=31 // pred_check
          %p194 = pneg %p193
        $region34: #{tpu_custom_call.1} parent=31 // pred_check_branch
          %196 = sbr.rel (%p194) target = $region36
        $region35: #{tpu_custom_call.1} parent=31 // pred_region
          %s197 = smul.u32 %s23, 16
          %s198 = smul.u32 %s197, 24
          %s199 = scalar_lea.vmem %s191, %s198
          %v200 = vld [vmem:[%s199] sm:$0xff]
          %v201 = vld [vmem:[%s199 + $0x8] sm:$0xff]
          %v202 = vld [vmem:[%s199 + $0x18] sm:$0xff]
          %v203 = vld [vmem:[%s199 + $0x20] sm:$0xff]
          %v204 = vld [vmem:[%s199 + $0x30] sm:$0xff]
          %v205 = vld [vmem:[%s199 + $0x38] sm:$0xff]
          %v206 = vld [vmem:[%s199 + $0x48] sm:$0xff]
          %v207 = vld [vmem:[%s199 + $0x50] sm:$0xff]
          %v208 = vld [vmem:[%s199 + $0x60] sm:$0xff]
          %v209 = vld [vmem:[%s199 + $0x68] sm:$0xff]
          %v210 = vld [vmem:[%s199 + $0x78] sm:$0xff]
          %v211 = vld [vmem:[%s199 + $0x80] sm:$0xff]
          %v212 = vld [vmem:[%s199 + $0x90] sm:$0xff]
          %v213 = vld [vmem:[%s199 + $0x98] sm:$0xff]
          %v214 = vld [vmem:[%s199 + $0xa8] sm:$0xff]
          %v215 = vld [vmem:[%s199 + $0xb0] sm:$0xff]
          %v216 = vld [vmem:[%s199 + $0xc0] sm:$0xff]
          %v217 = vld [vmem:[%s199 + $0xc8] sm:$0xff]
          %v218 = vld [vmem:[%s199 + $0xd8] sm:$0xff]
          %v219 = vld [vmem:[%s199 + $0xe0] sm:$0xff]
          %v220 = vld [vmem:[%s199 + $0xf0] sm:$0xff]
          %v221 = vld [vmem:[%s199 + $0xf8] sm:$0xff]
          %v222 = vld [vmem:[%s199 + $0x108] sm:$0xff]
          %v223 = vld [vmem:[%s199 + $0x110] sm:$0xff]
          %v224 = vld [vmem:[%s199 + $0x120] sm:$0xff]
          %v225 = vld [vmem:[%s199 + $0x128] sm:$0xff]
          %v226 = vld [vmem:[%s199 + $0x138] sm:$0xff]
          %v227 = vld [vmem:[%s199 + $0x140] sm:$0xff]
          %v228 = vld [vmem:[%s199 + $0x150] sm:$0xff]
          %v229 = vld [vmem:[%s199 + $0x158] sm:$0xff]
          %v230 = vld [vmem:[%s199 + $0x168] sm:$0xff]
          %v231 = vld [vmem:[%s199 + $0x170] sm:$0xff]
          %v232 = vld [vmem:[%s199 + $0x1] sm:$0xff]
          %v233 = vld [vmem:[%s199 + $0x9] sm:$0xff]
          %v234 = vld [vmem:[%s199 + $0x19] sm:$0xff]
          %v235 = vld [vmem:[%s199 + $0x21] sm:$0xff]
          %v236 = vld [vmem:[%s199 + $0x31] sm:$0xff]
          %v237 = vld [vmem:[%s199 + $0x39] sm:$0xff]
          %v238 = vld [vmem:[%s199 + $0x49] sm:$0xff]
          %v239 = vld [vmem:[%s199 + $0x51] sm:$0xff]
          %v240 = vld [vmem:[%s199 + $0x61] sm:$0xff]
          %v241 = vld [vmem:[%s199 + $0x69] sm:$0xff]
          %v242 = vld [vmem:[%s199 + $0x79] sm:$0xff]
          %v243 = vld [vmem:[%s199 + $0x81] sm:$0xff]
          %v244 = vld [vmem:[%s199 + $0x91] sm:$0xff]
          %v245 = vld [vmem:[%s199 + $0x99] sm:$0xff]
          %v246 = vld [vmem:[%s199 + $0xa9] sm:$0xff]
          %v247 = vld [vmem:[%s199 + $0xb1] sm:$0xff]
          %v248 = vld [vmem:[%s199 + $0xc1] sm:$0xff]
          %v249 = vld [vmem:[%s199 + $0xc9] sm:$0xff]
          %v250 = vld [vmem:[%s199 + $0xd9] sm:$0xff]
          %v251 = vld [vmem:[%s199 + $0xe1] sm:$0xff]
          %v252 = vld [vmem:[%s199 + $0xf1] sm:$0xff]
          %v253 = vld [vmem:[%s199 + $0xf9] sm:$0xff]
          %v254 = vld [vmem:[%s199 + $0x109] sm:$0xff]
          %v255 = vld [vmem:[%s199 + $0x111] sm:$0xff]
          %v256 = vld [vmem:[%s199 + $0x121] sm:$0xff]
          %v257 = vld [vmem:[%s199 + $0x129] sm:$0xff]
          %v258 = vld [vmem:[%s199 + $0x139] sm:$0xff]
          %v259 = vld [vmem:[%s199 + $0x141] sm:$0xff]
          %v260 = vld [vmem:[%s199 + $0x151] sm:$0xff]
          %v261 = vld [vmem:[%s199 + $0x159] sm:$0xff]
          %v262 = vld [vmem:[%s199 + $0x169] sm:$0xff]
          %v263 = vld [vmem:[%s199 + $0x171] sm:$0xff]
          %v264 = vld [vmem:[%s199 + $0x2] sm:$0xff]
          %v265 = vld [vmem:[%s199 + $0xa] sm:$0xff]
          %v266 = vld [vmem:[%s199 + $0x1a] sm:$0xff]
          %v267 = vld [vmem:[%s199 + $0x22] sm:$0xff]
          %v268 = vld [vmem:[%s199 + $0x32] sm:$0xff]
          %v269 = vld [vmem:[%s199 + $0x3a] sm:$0xff]
          %v270 = vld [vmem:[%s199 + $0x4a] sm:$0xff]
          %v271 = vld [vmem:[%s199 + $0x52] sm:$0xff]
          %v272 = vld [vmem:[%s199 + $0x62] sm:$0xff]
          %v273 = vld [vmem:[%s199 + $0x6a] sm:$0xff]
          %v274 = vld [vmem:[%s199 + $0x7a] sm:$0xff]
          %v275 = vld [vmem:[%s199 + $0x82] sm:$0xff]
          %v276 = vld [vmem:[%s199 + $0x92] sm:$0xff]
          %v277 = vld [vmem:[%s199 + $0x9a] sm:$0xff]
          %v278 = vld [vmem:[%s199 + $0xaa] sm:$0xff]
          %v279 = vld [vmem:[%s199 + $0xb2] sm:$0xff]
          %v280 = vld [vmem:[%s199 + $0xc2] sm:$0xff]
          %v281 = vld [vmem:[%s199 + $0xca] sm:$0xff]
          %v282 = vld [vmem:[%s199 + $0xda] sm:$0xff]
          %v283 = vld [vmem:[%s199 + $0xe2] sm:$0xff]
          %v284 = vld [vmem:[%s199 + $0xf2] sm:$0xff]
          %v285 = vld [vmem:[%s199 + $0xfa] sm:$0xff]
          %v286 = vld [vmem:[%s199 + $0x10a] sm:$0xff]
          %v287 = vld [vmem:[%s199 + $0x112] sm:$0xff]
          %v288 = vld [vmem:[%s199 + $0x122] sm:$0xff]
          %v289 = vld [vmem:[%s199 + $0x12a] sm:$0xff]
          %v290 = vld [vmem:[%s199 + $0x13a] sm:$0xff]
          %v291 = vld [vmem:[%s199 + $0x142] sm:$0xff]
          %v292 = vld [vmem:[%s199 + $0x152] sm:$0xff]
          %v293 = vld [vmem:[%s199 + $0x15a] sm:$0xff]
          %v294 = vld [vmem:[%s199 + $0x16a] sm:$0xff]
          %v295 = vld [vmem:[%s199 + $0x172] sm:$0xff]
          %s296 = sadd.s32 %s197, 1
          %s297 = smul.u32 %s296, 24
          %s298 = scalar_lea.vmem %s191, %s297
          %v299 = vld [vmem:[%s298] sm:$0xff]
          %v300 = vld [vmem:[%s298 + $0x8] sm:$0xff]
          %v301 = vld [vmem:[%s298 + $0x18] sm:$0xff]
          %v302 = vld [vmem:[%s298 + $0x20] sm:$0xff]
          %v303 = vld [vmem:[%s298 + $0x30] sm:$0xff]
          %v304 = vld [vmem:[%s298 + $0x38] sm:$0xff]
          %v305 = vld [vmem:[%s298 + $0x48] sm:$0xff]
          %v306 = vld [vmem:[%s298 + $0x50] sm:$0xff]
          %v307 = vld [vmem:[%s298 + $0x60] sm:$0xff]
          %v308 = vld [vmem:[%s298 + $0x68] sm:$0xff]
          %v309 = vld [vmem:[%s298 + $0x78] sm:$0xff]
          %v310 = vld [vmem:[%s298 + $0x80] sm:$0xff]
          %v311 = vld [vmem:[%s298 + $0x90] sm:$0xff]
          %v312 = vld [vmem:[%s298 + $0x98] sm:$0xff]
          %v313 = vld [vmem:[%s298 + $0xa8] sm:$0xff]
          %v314 = vld [vmem:[%s298 + $0xb0] sm:$0xff]
          %v315 = vld [vmem:[%s298 + $0xc0] sm:$0xff]
          %v316 = vld [vmem:[%s298 + $0xc8] sm:$0xff]
          %v317 = vld [vmem:[%s298 + $0xd8] sm:$0xff]
          %v318 = vld [vmem:[%s298 + $0xe0] sm:$0xff]
          %v319 = vld [vmem:[%s298 + $0xf0] sm:$0xff]
          %v320 = vld [vmem:[%s298 + $0xf8] sm:$0xff]
          %v321 = vld [vmem:[%s298 + $0x108] sm:$0xff]
          %v322 = vld [vmem:[%s298 + $0x110] sm:$0xff]
          %v323 = vld [vmem:[%s298 + $0x120] sm:$0xff]
          %v324 = vld [vmem:[%s298 + $0x128] sm:$0xff]
          %v325 = vld [vmem:[%s298 + $0x138] sm:$0xff]
          %v326 = vld [vmem:[%s298 + $0x140] sm:$0xff]
          %v327 = vld [vmem:[%s298 + $0x150] sm:$0xff]
          %v328 = vld [vmem:[%s298 + $0x158] sm:$0xff]
          %v329 = vld [vmem:[%s298 + $0x168] sm:$0xff]
          %v330 = vld [vmem:[%s298 + $0x170] sm:$0xff]
          %v331 = vld [vmem:[%s298 + $0x1] sm:$0xff]
          %v332 = vld [vmem:[%s298 + $0x9] sm:$0xff]
          %v333 = vld [vmem:[%s298 + $0x19] sm:$0xff]
          %v334 = vld [vmem:[%s298 + $0x21] sm:$0xff]
          %v335 = vld [vmem:[%s298 + $0x31] sm:$0xff]
          %v336 = vld [vmem:[%s298 + $0x39] sm:$0xff]
          %v337 = vld [vmem:[%s298 + $0x49] sm:$0xff]
          %v338 = vld [vmem:[%s298 + $0x51] sm:$0xff]
          %v339 = vld [vmem:[%s298 + $0x61] sm:$0xff]
          %v340 = vld [vmem:[%s298 + $0x69] sm:$0xff]
          %v341 = vld [vmem:[%s298 + $0x79] sm:$0xff]
          %v342 = vld [vmem:[%s298 + $0x81] sm:$0xff]
          %v343 = vld [vmem:[%s298 + $0x91] sm:$0xff]
          %v344 = vld [vmem:[%s298 + $0x99] sm:$0xff]
          %v345 = vld [vmem:[%s298 + $0xa9] sm:$0xff]
          %v346 = vld [vmem:[%s298 + $0xb1] sm:$0xff]
          %v347 = vld [vmem:[%s298 + $0xc1] sm:$0xff]
          %v348 = vld [vmem:[%s298 + $0xc9] sm:$0xff]
          %v349 = vld [vmem:[%s298 + $0xd9] sm:$0xff]
          %v350 = vld [vmem:[%s298 + $0xe1] sm:$0xff]
          %v351 = vld [vmem:[%s298 + $0xf1] sm:$0xff]
          %v352 = vld [vmem:[%s298 + $0xf9] sm:$0xff]
          %v353 = vld [vmem:[%s298 + $0x109] sm:$0xff]
          %v354 = vld [vmem:[%s298 + $0x111] sm:$0xff]
          %v355 = vld [vmem:[%s298 + $0x121] sm:$0xff]
          %v356 = vld [vmem:[%s298 + $0x129] sm:$0xff]
          %v357 = vld [vmem:[%s298 + $0x139] sm:$0xff]
          %v358 = vld [vmem:[%s298 + $0x141] sm:$0xff]
          %v359 = vld [vmem:[%s298 + $0x151] sm:$0xff]
          %v360 = vld [vmem:[%s298 + $0x159] sm:$0xff]
          %v361 = vld [vmem:[%s298 + $0x169] sm:$0xff]
          %v362 = vld [vmem:[%s298 + $0x171] sm:$0xff]
          %v363 = vld [vmem:[%s298 + $0x2] sm:$0xff]
          %v364 = vld [vmem:[%s298 + $0xa] sm:$0xff]
          %v365 = vld [vmem:[%s298 + $0x1a] sm:$0xff]
          %v366 = vld [vmem:[%s298 + $0x22] sm:$0xff]
          %v367 = vld [vmem:[%s298 + $0x32] sm:$0xff]
          %v368 = vld [vmem:[%s298 + $0x3a] sm:$0xff]
          %v369 = vld [vmem:[%s298 + $0x4a] sm:$0xff]
          %v370 = vld [vmem:[%s298 + $0x52] sm:$0xff]
          %v371 = vld [vmem:[%s298 + $0x62] sm:$0xff]
          %v372 = vld [vmem:[%s298 + $0x6a] sm:$0xff]
          %v373 = vld [vmem:[%s298 + $0x7a] sm:$0xff]
          %v374 = vld [vmem:[%s298 + $0x82] sm:$0xff]
          %v375 = vld [vmem:[%s298 + $0x92] sm:$0xff]
          %v376 = vld [vmem:[%s298 + $0x9a] sm:$0xff]
          %v377 = vld [vmem:[%s298 + $0xaa] sm:$0xff]
          %v378 = vld [vmem:[%s298 + $0xb2] sm:$0xff]
          %v379 = vld [vmem:[%s298 + $0xc2] sm:$0xff]
          %v380 = vld [vmem:[%s298 + $0xca] sm:$0xff]
          %v381 = vld [vmem:[%s298 + $0xda] sm:$0xff]
          %v382 = vld [vmem:[%s298 + $0xe2] sm:$0xff]
          %v383 = vld [vmem:[%s298 + $0xf2] sm:$0xff]
          %v384 = vld [vmem:[%s298 + $0xfa] sm:$0xff]
          %v385 = vld [vmem:[%s298 + $0x10a] sm:$0xff]
          %v386 = vld [vmem:[%s298 + $0x112] sm:$0xff]
          %v387 = vld [vmem:[%s298 + $0x122] sm:$0xff]
          %v388 = vld [vmem:[%s298 + $0x12a] sm:$0xff]
          %v389 = vld [vmem:[%s298 + $0x13a] sm:$0xff]
          %v390 = vld [vmem:[%s298 + $0x142] sm:$0xff]
          %v391 = vld [vmem:[%s298 + $0x152] sm:$0xff]
          %v392 = vld [vmem:[%s298 + $0x15a] sm:$0xff]
          %v393 = vld [vmem:[%s298 + $0x16a] sm:$0xff]
          %v394 = vld [vmem:[%s298 + $0x172] sm:$0xff]
          %s395 = sadd.s32 %s197, 2
          %s396 = smul.u32 %s395, 24
          %s397 = scalar_lea.vmem %s191, %s396
          %v398 = vld [vmem:[%s397] sm:$0xff]
          %v399 = vld [vmem:[%s397 + $0x8] sm:$0xff]
          %v400 = vld [vmem:[%s397 + $0x18] sm:$0xff]
          %v401 = vld [vmem:[%s397 + $0x20] sm:$0xff]
          %v402 = vld [vmem:[%s397 + $0x30] sm:$0xff]
          %v403 = vld [vmem:[%s397 + $0x38] sm:$0xff]
          %v404 = vld [vmem:[%s397 + $0x48] sm:$0xff]
          %v405 = vld [vmem:[%s397 + $0x50] sm:$0xff]
          %v406 = vld [vmem:[%s397 + $0x60] sm:$0xff]
          %v407 = vld [vmem:[%s397 + $0x68] sm:$0xff]
          %v408 = vld [vmem:[%s397 + $0x78] sm:$0xff]
          %v409 = vld [vmem:[%s397 + $0x80] sm:$0xff]
          %v410 = vld [vmem:[%s397 + $0x90] sm:$0xff]
          %v411 = vld [vmem:[%s397 + $0x98] sm:$0xff]
          %v412 = vld [vmem:[%s397 + $0xa8] sm:$0xff]
          %v413 = vld [vmem:[%s397 + $0xb0] sm:$0xff]
          %v414 = vld [vmem:[%s397 + $0xc0] sm:$0xff]
          %v415 = vld [vmem:[%s397 + $0xc8] sm:$0xff]
          %v416 = vld [vmem:[%s397 + $0xd8] sm:$0xff]
          %v417 = vld [vmem:[%s397 + $0xe0] sm:$0xff]
          %v418 = vld [vmem:[%s397 + $0xf0] sm:$0xff]
          %v419 = vld [vmem:[%s397 + $0xf8] sm:$0xff]
          %v420 = vld [vmem:[%s397 + $0x108] sm:$0xff]
          %v421 = vld [vmem:[%s397 + $0x110] sm:$0xff]
          %v422 = vld [vmem:[%s397 + $0x120] sm:$0xff]
          %v423 = vld [vmem:[%s397 + $0x128] sm:$0xff]
          %v424 = vld [vmem:[%s397 + $0x138] sm:$0xff]
          %v425 = vld [vmem:[%s397 + $0x140] sm:$0xff]
          %v426 = vld [vmem:[%s397 + $0x150] sm:$0xff]
          %v427 = vld [vmem:[%s397 + $0x158] sm:$0xff]
          %v428 = vld [vmem:[%s397 + $0x168] sm:$0xff]
          %v429 = vld [vmem:[%s397 + $0x170] sm:$0xff]
          %v430 = vld [vmem:[%s397 + $0x1] sm:$0xff]
          %v431 = vld [vmem:[%s397 + $0x9] sm:$0xff]
          %v432 = vld [vmem:[%s397 + $0x19] sm:$0xff]
          %v433 = vld [vmem:[%s397 + $0x21] sm:$0xff]
          %v434 = vld [vmem:[%s397 + $0x31] sm:$0xff]
          %v435 = vld [vmem:[%s397 + $0x39] sm:$0xff]
          %v436 = vld [vmem:[%s397 + $0x49] sm:$0xff]
          %v437 = vld [vmem:[%s397 + $0x51] sm:$0xff]
          %v438 = vld [vmem:[%s397 + $0x61] sm:$0xff]
          %v439 = vld [vmem:[%s397 + $0x69] sm:$0xff]
          %v440 = vld [vmem:[%s397 + $0x79] sm:$0xff]
          %v441 = vld [vmem:[%s397 + $0x81] sm:$0xff]
          %v442 = vld [vmem:[%s397 + $0x91] sm:$0xff]
          %v443 = vld [vmem:[%s397 + $0x99] sm:$0xff]
          %v444 = vld [vmem:[%s397 + $0xa9] sm:$0xff]
          %v445 = vld [vmem:[%s397 + $0xb1] sm:$0xff]
          %v446 = vld [vmem:[%s397 + $0xc1] sm:$0xff]
          %v447 = vld [vmem:[%s397 + $0xc9] sm:$0xff]
          %v448 = vld [vmem:[%s397 + $0xd9] sm:$0xff]
          %v449 = vld [vmem:[%s397 + $0xe1] sm:$0xff]
          %v450 = vld [vmem:[%s397 + $0xf1] sm:$0xff]
          %v451 = vld [vmem:[%s397 + $0xf9] sm:$0xff]
          %v452 = vld [vmem:[%s397 + $0x109] sm:$0xff]
          %v453 = vld [vmem:[%s397 + $0x111] sm:$0xff]
          %v454 = vld [vmem:[%s397 + $0x121] sm:$0xff]
          %v455 = vld [vmem:[%s397 + $0x129] sm:$0xff]
          %v456 = vld [vmem:[%s397 + $0x139] sm:$0xff]
          %v457 = vld [vmem:[%s397 + $0x141] sm:$0xff]
          %v458 = vld [vmem:[%s397 + $0x151] sm:$0xff]
          %v459 = vld [vmem:[%s397 + $0x159] sm:$0xff]
          %v460 = vld [vmem:[%s397 + $0x169] sm:$0xff]
          %v461 = vld [vmem:[%s397 + $0x171] sm:$0xff]
          %v462 = vld [vmem:[%s397 + $0x2] sm:$0xff]
          %v463 = vld [vmem:[%s397 + $0xa] sm:$0xff]
          %v464 = vld [vmem:[%s397 + $0x1a] sm:$0xff]
          %v465 = vld [vmem:[%s397 + $0x22] sm:$0xff]
          %v466 = vld [vmem:[%s397 + $0x32] sm:$0xff]
          %v467 = vld [vmem:[%s397 + $0x3a] sm:$0xff]
          %v468 = vld [vmem:[%s397 + $0x4a] sm:$0xff]
          %v469 = vld [vmem:[%s397 + $0x52] sm:$0xff]
          %v470 = vld [vmem:[%s397 + $0x62] sm:$0xff]
          %v471 = vld [vmem:[%s397 + $0x6a] sm:$0xff]
          %v472 = vld [vmem:[%s397 + $0x7a] sm:$0xff]
          %v473 = vld [vmem:[%s397 + $0x82] sm:$0xff]
          %v474 = vld [vmem:[%s397 + $0x92] sm:$0xff]
          %v475 = vld [vmem:[%s397 + $0x9a] sm:$0xff]
          %v476 = vld [vmem:[%s397 + $0xaa] sm:$0xff]
          %v477 = vld [vmem:[%s397 + $0xb2] sm:$0xff]
          %v478 = vld [vmem:[%s397 + $0xc2] sm:$0xff]
          %v479 = vld [vmem:[%s397 + $0xca] sm:$0xff]
          %v480 = vld [vmem:[%s397 + $0xda] sm:$0xff]
          %v481 = vld [vmem:[%s397 + $0xe2] sm:$0xff]
          %v482 = vld [vmem:[%s397 + $0xf2] sm:$0xff]
          %v483 = vld [vmem:[%s397 + $0xfa] sm:$0xff]
          %v484 = vld [vmem:[%s397 + $0x10a] sm:$0xff]
          %v485 = vld [vmem:[%s397 + $0x112] sm:$0xff]
          %v486 = vld [vmem:[%s397 + $0x122] sm:$0xff]
          %v487 = vld [vmem:[%s397 + $0x12a] sm:$0xff]
          %v488 = vld [vmem:[%s397 + $0x13a] sm:$0xff]
          %v489 = vld [vmem:[%s397 + $0x142] sm:$0xff]
          %v490 = vld [vmem:[%s397 + $0x152] sm:$0xff]
          %v491 = vld [vmem:[%s397 + $0x15a] sm:$0xff]
          %v492 = vld [vmem:[%s397 + $0x16a] sm:$0xff]
          %v493 = vld [vmem:[%s397 + $0x172] sm:$0xff]
          %526 = vrot.lane.b32.xlu0 %v232, 4
          %v527 = vpop.permute.xlu0 %526
          %528 = vrot.lane.b32.xlu0 %v233, 4
          %v529 = vpop.permute.xlu0 %528
          %530 = vrot.lane.b32.xlu0 %v234, 4
          %v531 = vpop.permute.xlu0 %530
          %532 = vrot.lane.b32.xlu0 %v235, 4
          %v533 = vpop.permute.xlu0 %532
          %534 = vrot.lane.b32.xlu0 %v236, 4
          %v535 = vpop.permute.xlu0 %534
          %536 = vrot.lane.b32.xlu0 %v237, 4
          %v537 = vpop.permute.xlu0 %536
          %538 = vrot.lane.b32.xlu0 %v238, 4
          %v539 = vpop.permute.xlu0 %538
          %540 = vrot.lane.b32.xlu0 %v239, 4
          %v541 = vpop.permute.xlu0 %540
          %542 = vrot.lane.b32.xlu0 %v240, 4
          %v543 = vpop.permute.xlu0 %542
          %544 = vrot.lane.b32.xlu0 %v241, 4
          %v545 = vpop.permute.xlu0 %544
          %546 = vrot.lane.b32.xlu0 %v242, 4
          %v547 = vpop.permute.xlu0 %546
          %548 = vrot.lane.b32.xlu0 %v243, 4
          %v549 = vpop.permute.xlu0 %548
          %550 = vrot.lane.b32.xlu0 %v244, 4
          %v551 = vpop.permute.xlu0 %550
          %552 = vrot.lane.b32.xlu0 %v245, 4
          %v553 = vpop.permute.xlu0 %552
          %554 = vrot.lane.b32.xlu0 %v246, 4
          %v555 = vpop.permute.xlu0 %554
          %556 = vrot.lane.b32.xlu0 %v247, 4
          %v557 = vpop.permute.xlu0 %556
          %558 = vrot.lane.b32.xlu0 %v248, 4
          %v559 = vpop.permute.xlu0 %558
          %560 = vrot.lane.b32.xlu0 %v249, 4
          %v561 = vpop.permute.xlu0 %560
          %562 = vrot.lane.b32.xlu0 %v250, 4
          %v563 = vpop.permute.xlu0 %562
          %564 = vrot.lane.b32.xlu0 %v251, 4
          %v565 = vpop.permute.xlu0 %564
          %566 = vrot.lane.b32.xlu0 %v252, 4
          %v567 = vpop.permute.xlu0 %566
          %568 = vrot.lane.b32.xlu0 %v253, 4
          %v569 = vpop.permute.xlu0 %568
          %570 = vrot.lane.b32.xlu0 %v254, 4
          %v571 = vpop.permute.xlu0 %570
          %572 = vrot.lane.b32.xlu0 %v255, 4
          %v573 = vpop.permute.xlu0 %572
          %574 = vrot.lane.b32.xlu0 %v256, 4
          %v575 = vpop.permute.xlu0 %574
          %576 = vrot.lane.b32.xlu0 %v257, 4
          %v577 = vpop.permute.xlu0 %576
          %578 = vrot.lane.b32.xlu0 %v258, 4
          %v579 = vpop.permute.xlu0 %578
          %580 = vrot.lane.b32.xlu0 %v259, 4
          %v581 = vpop.permute.xlu0 %580
          %582 = vrot.lane.b32.xlu0 %v260, 4
          %v583 = vpop.permute.xlu0 %582
          %584 = vrot.lane.b32.xlu0 %v261, 4
          %v585 = vpop.permute.xlu0 %584
          %586 = vrot.lane.b32.xlu0 %v262, 4
          %v587 = vpop.permute.xlu0 %586
          %588 = vrot.lane.b32.xlu0 %v263, 4
          %v589 = vpop.permute.xlu0 %588
          %654 = vrot.lane.b32.xlu0 %v264, 8
          %v655 = vpop.permute.xlu0 %654
          %656 = vrot.lane.b32.xlu0 %v265, 8
          %v657 = vpop.permute.xlu0 %656
          %658 = vrot.lane.b32.xlu0 %v266, 8
          %v659 = vpop.permute.xlu0 %658
          %660 = vrot.lane.b32.xlu0 %v267, 8
          %v661 = vpop.permute.xlu0 %660
          %662 = vrot.lane.b32.xlu0 %v268, 8
          %v663 = vpop.permute.xlu0 %662
          %664 = vrot.lane.b32.xlu0 %v269, 8
          %v665 = vpop.permute.xlu0 %664
          %666 = vrot.lane.b32.xlu0 %v270, 8
          %v667 = vpop.permute.xlu0 %666
          %668 = vrot.lane.b32.xlu0 %v271, 8
          %v669 = vpop.permute.xlu0 %668
          %670 = vrot.lane.b32.xlu0 %v272, 8
          %v671 = vpop.permute.xlu0 %670
          %672 = vrot.lane.b32.xlu0 %v273, 8
          %v673 = vpop.permute.xlu0 %672
          %674 = vrot.lane.b32.xlu0 %v274, 8
          %v675 = vpop.permute.xlu0 %674
          %676 = vrot.lane.b32.xlu0 %v275, 8
          %v677 = vpop.permute.xlu0 %676
          %678 = vrot.lane.b32.xlu0 %v276, 8
          %v679 = vpop.permute.xlu0 %678
          %680 = vrot.lane.b32.xlu0 %v277, 8
          %v681 = vpop.permute.xlu0 %680
          %682 = vrot.lane.b32.xlu0 %v278, 8
          %v683 = vpop.permute.xlu0 %682
          %684 = vrot.lane.b32.xlu0 %v279, 8
          %v685 = vpop.permute.xlu0 %684
          %686 = vrot.lane.b32.xlu0 %v280, 8
          %v687 = vpop.permute.xlu0 %686
          %688 = vrot.lane.b32.xlu0 %v281, 8
          %v689 = vpop.permute.xlu0 %688
          %690 = vrot.lane.b32.xlu0 %v282, 8
          %v691 = vpop.permute.xlu0 %690
          %692 = vrot.lane.b32.xlu0 %v283, 8
          %v693 = vpop.permute.xlu0 %692
          %694 = vrot.lane.b32.xlu0 %v284, 8
          %v695 = vpop.permute.xlu0 %694
          %696 = vrot.lane.b32.xlu0 %v285, 8
          %v697 = vpop.permute.xlu0 %696
          %698 = vrot.lane.b32.xlu0 %v286, 8
          %v699 = vpop.permute.xlu0 %698
          %700 = vrot.lane.b32.xlu0 %v287, 8
          %v701 = vpop.permute.xlu0 %700
          %702 = vrot.lane.b32.xlu0 %v288, 8
          %v703 = vpop.permute.xlu0 %702
          %704 = vrot.lane.b32.xlu0 %v289, 8
          %v705 = vpop.permute.xlu0 %704
          %706 = vrot.lane.b32.xlu0 %v290, 8
          %v707 = vpop.permute.xlu0 %706
          %708 = vrot.lane.b32.xlu0 %v291, 8
          %v709 = vpop.permute.xlu0 %708
          %710 = vrot.lane.b32.xlu0 %v292, 8
          %v711 = vpop.permute.xlu0 %710
          %712 = vrot.lane.b32.xlu0 %v293, 8
          %v713 = vpop.permute.xlu0 %712
          %714 = vrot.lane.b32.xlu0 %v294, 8
          %v715 = vpop.permute.xlu0 %714
          %716 = vrot.lane.b32.xlu0 %v295, 8
          %v717 = vpop.permute.xlu0 %716
          %782 = vrot.lane.b32.xlu0 %v299, 12
          %v783 = vpop.permute.xlu0 %782
          %784 = vrot.lane.b32.xlu0 %v300, 12
          %v785 = vpop.permute.xlu0 %784
          %786 = vrot.lane.b32.xlu0 %v301, 12
          %v787 = vpop.permute.xlu0 %786
          %788 = vrot.lane.b32.xlu0 %v302, 12
          %v789 = vpop.permute.xlu0 %788
          %790 = vrot.lane.b32.xlu0 %v303, 12
          %v791 = vpop.permute.xlu0 %790
          %792 = vrot.lane.b32.xlu0 %v304, 12
          %v793 = vpop.permute.xlu0 %792
          %794 = vrot.lane.b32.xlu0 %v305, 12
          %v795 = vpop.permute.xlu0 %794
          %796 = vrot.lane.b32.xlu0 %v306, 12
          %v797 = vpop.permute.xlu0 %796
          %798 = vrot.lane.b32.xlu0 %v307, 12
          %v799 = vpop.permute.xlu0 %798
          %800 = vrot.lane.b32.xlu0 %v308, 12
          %v801 = vpop.permute.xlu0 %800
          %802 = vrot.lane.b32.xlu0 %v309, 12
          %v803 = vpop.permute.xlu0 %802
          %804 = vrot.lane.b32.xlu0 %v310, 12
          %v805 = vpop.permute.xlu0 %804
          %806 = vrot.lane.b32.xlu0 %v311, 12
          %v807 = vpop.permute.xlu0 %806
          %808 = vrot.lane.b32.xlu0 %v312, 12
          %v809 = vpop.permute.xlu0 %808
          %810 = vrot.lane.b32.xlu0 %v313, 12
          %v811 = vpop.permute.xlu0 %810
          %812 = vrot.lane.b32.xlu0 %v314, 12
          %v813 = vpop.permute.xlu0 %812
          %814 = vrot.lane.b32.xlu0 %v315, 12
          %v815 = vpop.permute.xlu0 %814
          %816 = vrot.lane.b32.xlu0 %v316, 12
          %v817 = vpop.permute.xlu0 %816
          %818 = vrot.lane.b32.xlu0 %v317, 12
          %v819 = vpop.permute.xlu0 %818
          %820 = vrot.lane.b32.xlu0 %v318, 12
          %v821 = vpop.permute.xlu0 %820
          %822 = vrot.lane.b32.xlu0 %v319, 12
          %v823 = vpop.permute.xlu0 %822
          %824 = vrot.lane.b32.xlu0 %v320, 12
          %v825 = vpop.permute.xlu0 %824
          %826 = vrot.lane.b32.xlu0 %v321, 12
          %v827 = vpop.permute.xlu0 %826
          %828 = vrot.lane.b32.xlu0 %v322, 12
          %v829 = vpop.permute.xlu0 %828
          %830 = vrot.lane.b32.xlu0 %v323, 12
          %v831 = vpop.permute.xlu0 %830
          %832 = vrot.lane.b32.xlu0 %v324, 12
          %v833 = vpop.permute.xlu0 %832
          %834 = vrot.lane.b32.xlu0 %v325, 12
          %v835 = vpop.permute.xlu0 %834
          %836 = vrot.lane.b32.xlu0 %v326, 12
          %v837 = vpop.permute.xlu0 %836
          %838 = vrot.lane.b32.xlu0 %v327, 12
          %v839 = vpop.permute.xlu0 %838
          %840 = vrot.lane.b32.xlu0 %v328, 12
          %v841 = vpop.permute.xlu0 %840
          %842 = vrot.lane.b32.xlu0 %v329, 12
          %v843 = vpop.permute.xlu0 %842
          %844 = vrot.lane.b32.xlu0 %v330, 12
          %v845 = vpop.permute.xlu0 %844
          %910 = vrot.lane.b32.xlu0 %v331, 16
          %v911 = vpop.permute.xlu0 %910
          %912 = vrot.lane.b32.xlu0 %v332, 16
          %v913 = vpop.permute.xlu0 %912
          %914 = vrot.lane.b32.xlu0 %v333, 16
          %v915 = vpop.permute.xlu0 %914
          %916 = vrot.lane.b32.xlu0 %v334, 16
          %v917 = vpop.permute.xlu0 %916
          %918 = vrot.lane.b32.xlu0 %v335, 16
          %v919 = vpop.permute.xlu0 %918
          %920 = vrot.lane.b32.xlu0 %v336, 16
          %v921 = vpop.permute.xlu0 %920
          %922 = vrot.lane.b32.xlu0 %v337, 16
          %v923 = vpop.permute.xlu0 %922
          %924 = vrot.lane.b32.xlu0 %v338, 16
          %v925 = vpop.permute.xlu0 %924
          %926 = vrot.lane.b32.xlu0 %v339, 16
          %v927 = vpop.permute.xlu0 %926
          %928 = vrot.lane.b32.xlu0 %v340, 16
          %v929 = vpop.permute.xlu0 %928
          %930 = vrot.lane.b32.xlu0 %v341, 16
          %v931 = vpop.permute.xlu0 %930
          %932 = vrot.lane.b32.xlu0 %v342, 16
          %v933 = vpop.permute.xlu0 %932
          %934 = vrot.lane.b32.xlu0 %v343, 16
          %v935 = vpop.permute.xlu0 %934
          %936 = vrot.lane.b32.xlu0 %v344, 16
          %v937 = vpop.permute.xlu0 %936
          %938 = vrot.lane.b32.xlu0 %v345, 16
          %v939 = vpop.permute.xlu0 %938
          %940 = vrot.lane.b32.xlu0 %v346, 16
          %v941 = vpop.permute.xlu0 %940
          %942 = vrot.lane.b32.xlu0 %v347, 16
          %v943 = vpop.permute.xlu0 %942
          %944 = vrot.lane.b32.xlu0 %v348, 16
          %v945 = vpop.permute.xlu0 %944
          %946 = vrot.lane.b32.xlu0 %v349, 16
          %v947 = vpop.permute.xlu0 %946
          %948 = vrot.lane.b32.xlu0 %v350, 16
          %v949 = vpop.permute.xlu0 %948
          %950 = vrot.lane.b32.xlu0 %v351, 16
          %v951 = vpop.permute.xlu0 %950
          %952 = vrot.lane.b32.xlu0 %v352, 16
          %v953 = vpop.permute.xlu0 %952
          %954 = vrot.lane.b32.xlu0 %v353, 16
          %v955 = vpop.permute.xlu0 %954
          %956 = vrot.lane.b32.xlu0 %v354, 16
          %v957 = vpop.permute.xlu0 %956
          %958 = vrot.lane.b32.xlu0 %v355, 16
          %v959 = vpop.permute.xlu0 %958
          %960 = vrot.lane.b32.xlu0 %v356, 16
          %v961 = vpop.permute.xlu0 %960
          %962 = vrot.lane.b32.xlu0 %v357, 16
          %v963 = vpop.permute.xlu0 %962
          %964 = vrot.lane.b32.xlu0 %v358, 16
          %v965 = vpop.permute.xlu0 %964
          %966 = vrot.lane.b32.xlu0 %v359, 16
          %v967 = vpop.permute.xlu0 %966
          %968 = vrot.lane.b32.xlu0 %v360, 16
          %v969 = vpop.permute.xlu0 %968
          %970 = vrot.lane.b32.xlu0 %v361, 16
          %v971 = vpop.permute.xlu0 %970
          %972 = vrot.lane.b32.xlu0 %v362, 16
          %v973 = vpop.permute.xlu0 %972
          %1038 = vrot.lane.b32.xlu0 %v363, 20
          %v1039 = vpop.permute.xlu0 %1038
          %1040 = vrot.lane.b32.xlu0 %v364, 20
          %v1041 = vpop.permute.xlu0 %1040
          %1042 = vrot.lane.b32.xlu0 %v365, 20
          %v1043 = vpop.permute.xlu0 %1042
          %1044 = vrot.lane.b32.xlu0 %v366, 20
          %v1045 = vpop.permute.xlu0 %1044
          %1046 = vrot.lane.b32.xlu0 %v367, 20
          %v1047 = vpop.permute.xlu0 %1046
          %1048 = vrot.lane.b32.xlu0 %v368, 20
          %v1049 = vpop.permute.xlu0 %1048
          %1050 = vrot.lane.b32.xlu0 %v369, 20
          %v1051 = vpop.permute.xlu0 %1050
          %1052 = vrot.lane.b32.xlu0 %v370, 20
          %v1053 = vpop.permute.xlu0 %1052
          %1054 = vrot.lane.b32.xlu0 %v371, 20
          %v1055 = vpop.permute.xlu0 %1054
          %1056 = vrot.lane.b32.xlu0 %v372, 20
          %v1057 = vpop.permute.xlu0 %1056
          %1058 = vrot.lane.b32.xlu0 %v373, 20
          %v1059 = vpop.permute.xlu0 %1058
          %1060 = vrot.lane.b32.xlu0 %v374, 20
          %v1061 = vpop.permute.xlu0 %1060
          %1062 = vrot.lane.b32.xlu0 %v375, 20
          %v1063 = vpop.permute.xlu0 %1062
          %1064 = vrot.lane.b32.xlu0 %v376, 20
          %v1065 = vpop.permute.xlu0 %1064
          %1066 = vrot.lane.b32.xlu0 %v377, 20
          %v1067 = vpop.permute.xlu0 %1066
          %1068 = vrot.lane.b32.xlu0 %v378, 20
          %v1069 = vpop.permute.xlu0 %1068
          %1070 = vrot.lane.b32.xlu0 %v379, 20
          %v1071 = vpop.permute.xlu0 %1070
          %1072 = vrot.lane.b32.xlu0 %v380, 20
          %v1073 = vpop.permute.xlu0 %1072
          %1074 = vrot.lane.b32.xlu0 %v381, 20
          %v1075 = vpop.permute.xlu0 %1074
          %1076 = vrot.lane.b32.xlu0 %v382, 20
          %v1077 = vpop.permute.xlu0 %1076
          %1078 = vrot.lane.b32.xlu0 %v383, 20
          %v1079 = vpop.permute.xlu0 %1078
          %1080 = vrot.lane.b32.xlu0 %v384, 20
          %v1081 = vpop.permute.xlu0 %1080
          %1082 = vrot.lane.b32.xlu0 %v385, 20
          %v1083 = vpop.permute.xlu0 %1082
          %1084 = vrot.lane.b32.xlu0 %v386, 20
          %v1085 = vpop.permute.xlu0 %1084
          %1086 = vrot.lane.b32.xlu0 %v387, 20
          %v1087 = vpop.permute.xlu0 %1086
          %1088 = vrot.lane.b32.xlu0 %v388, 20
          %v1089 = vpop.permute.xlu0 %1088
          %1090 = vrot.lane.b32.xlu0 %v389, 20
          %v1091 = vpop.permute.xlu0 %1090
          %1092 = vrot.lane.b32.xlu0 %v390, 20
          %v1093 = vpop.permute.xlu0 %1092
          %1094 = vrot.lane.b32.xlu0 %v391, 20
          %v1095 = vpop.permute.xlu0 %1094
          %1096 = vrot.lane.b32.xlu0 %v392, 20
          %v1097 = vpop.permute.xlu0 %1096
          %1098 = vrot.lane.b32.xlu0 %v393, 20
          %v1099 = vpop.permute.xlu0 %1098
          %1100 = vrot.lane.b32.xlu0 %v394, 20
          %v1101 = vpop.permute.xlu0 %1100
          %1166 = vrot.lane.b32.xlu0 %v398, 24
          %v1167 = vpop.permute.xlu0 %1166
          %1168 = vrot.lane.b32.xlu0 %v399, 24
          %v1169 = vpop.permute.xlu0 %1168
          %1170 = vrot.lane.b32.xlu0 %v400, 24
          %v1171 = vpop.permute.xlu0 %1170
          %1172 = vrot.lane.b32.xlu0 %v401, 24
          %v1173 = vpop.permute.xlu0 %1172
          %1174 = vrot.lane.b32.xlu0 %v402, 24
          %v1175 = vpop.permute.xlu0 %1174
          %1176 = vrot.lane.b32.xlu0 %v403, 24
          %v1177 = vpop.permute.xlu0 %1176
          %1178 = vrot.lane.b32.xlu0 %v404, 24
          %v1179 = vpop.permute.xlu0 %1178
          %1180 = vrot.lane.b32.xlu0 %v405, 24
          %v1181 = vpop.permute.xlu0 %1180
          %1182 = vrot.lane.b32.xlu0 %v406, 24
          %v1183 = vpop.permute.xlu0 %1182
          %1184 = vrot.lane.b32.xlu0 %v407, 24
          %v1185 = vpop.permute.xlu0 %1184
          %1186 = vrot.lane.b32.xlu0 %v408, 24
          %v1187 = vpop.permute.xlu0 %1186
          %1188 = vrot.lane.b32.xlu0 %v409, 24
          %v1189 = vpop.permute.xlu0 %1188
          %1190 = vrot.lane.b32.xlu0 %v410, 24
          %v1191 = vpop.permute.xlu0 %1190
          %1192 = vrot.lane.b32.xlu0 %v411, 24
          %v1193 = vpop.permute.xlu0 %1192
          %1194 = vrot.lane.b32.xlu0 %v412, 24
          %v1195 = vpop.permute.xlu0 %1194
          %1196 = vrot.lane.b32.xlu0 %v413, 24
          %v1197 = vpop.permute.xlu0 %1196
          %1198 = vrot.lane.b32.xlu0 %v414, 24
          %v1199 = vpop.permute.xlu0 %1198
          %1200 = vrot.lane.b32.xlu0 %v415, 24
          %v1201 = vpop.permute.xlu0 %1200
          %1202 = vrot.lane.b32.xlu0 %v416, 24
          %v1203 = vpop.permute.xlu0 %1202
          %1204 = vrot.lane.b32.xlu0 %v417, 24
          %v1205 = vpop.permute.xlu0 %1204
          %1206 = vrot.lane.b32.xlu0 %v418, 24
          %v1207 = vpop.permute.xlu0 %1206
          %1208 = vrot.lane.b32.xlu0 %v419, 24
          %v1209 = vpop.permute.xlu0 %1208
          %1210 = vrot.lane.b32.xlu0 %v420, 24
          %v1211 = vpop.permute.xlu0 %1210
          %1212 = vrot.lane.b32.xlu0 %v421, 24
          %v1213 = vpop.permute.xlu0 %1212
          %1214 = vrot.lane.b32.xlu0 %v422, 24
          %v1215 = vpop.permute.xlu0 %1214
          %1216 = vrot.lane.b32.xlu0 %v423, 24
          %v1217 = vpop.permute.xlu0 %1216
          %1218 = vrot.lane.b32.xlu0 %v424, 24
          %v1219 = vpop.permute.xlu0 %1218
          %1220 = vrot.lane.b32.xlu0 %v425, 24
          %v1221 = vpop.permute.xlu0 %1220
          %1222 = vrot.lane.b32.xlu0 %v426, 24
          %v1223 = vpop.permute.xlu0 %1222
          %1224 = vrot.lane.b32.xlu0 %v427, 24
          %v1225 = vpop.permute.xlu0 %1224
          %1226 = vrot.lane.b32.xlu0 %v428, 24
          %v1227 = vpop.permute.xlu0 %1226
          %1228 = vrot.lane.b32.xlu0 %v429, 24
          %v1229 = vpop.permute.xlu0 %1228
          %1294 = vrot.lane.b32.xlu0 %v430, 28
          %v1295 = vpop.permute.xlu0 %1294
          %1296 = vrot.lane.b32.xlu0 %v431, 28
          %v1297 = vpop.permute.xlu0 %1296
          %1298 = vrot.lane.b32.xlu0 %v432, 28
          %v1299 = vpop.permute.xlu0 %1298
          %1300 = vrot.lane.b32.xlu0 %v433, 28
          %v1301 = vpop.permute.xlu0 %1300
          %1302 = vrot.lane.b32.xlu0 %v434, 28
          %v1303 = vpop.permute.xlu0 %1302
          %1304 = vrot.lane.b32.xlu0 %v435, 28
          %v1305 = vpop.permute.xlu0 %1304
          %1306 = vrot.lane.b32.xlu0 %v436, 28
          %v1307 = vpop.permute.xlu0 %1306
          %1308 = vrot.lane.b32.xlu0 %v437, 28
          %v1309 = vpop.permute.xlu0 %1308
          %1310 = vrot.lane.b32.xlu0 %v438, 28
          %v1311 = vpop.permute.xlu0 %1310
          %1312 = vrot.lane.b32.xlu0 %v439, 28
          %v1313 = vpop.permute.xlu0 %1312
          %1314 = vrot.lane.b32.xlu0 %v440, 28
          %v1315 = vpop.permute.xlu0 %1314
          %1316 = vrot.lane.b32.xlu0 %v441, 28
          %v1317 = vpop.permute.xlu0 %1316
          %1318 = vrot.lane.b32.xlu0 %v442, 28
          %v1319 = vpop.permute.xlu0 %1318
          %1320 = vrot.lane.b32.xlu0 %v443, 28
          %v1321 = vpop.permute.xlu0 %1320
          %1322 = vrot.lane.b32.xlu0 %v444, 28
          %v1323 = vpop.permute.xlu0 %1322
          %1324 = vrot.lane.b32.xlu0 %v445, 28
          %v1325 = vpop.permute.xlu0 %1324
          %1326 = vrot.lane.b32.xlu0 %v446, 28
          %v1327 = vpop.permute.xlu0 %1326
          %1328 = vrot.lane.b32.xlu0 %v447, 28
          %v1329 = vpop.permute.xlu0 %1328
          %1330 = vrot.lane.b32.xlu0 %v448, 28
          %v1331 = vpop.permute.xlu0 %1330
          %1332 = vrot.lane.b32.xlu0 %v449, 28
          %v1333 = vpop.permute.xlu0 %1332
          %1334 = vrot.lane.b32.xlu0 %v450, 28
          %v1335 = vpop.permute.xlu0 %1334
          %1336 = vrot.lane.b32.xlu0 %v451, 28
          %v1337 = vpop.permute.xlu0 %1336
          %1338 = vrot.lane.b32.xlu0 %v452, 28
          %v1339 = vpop.permute.xlu0 %1338
          %1340 = vrot.lane.b32.xlu0 %v453, 28
          %v1341 = vpop.permute.xlu0 %1340
          %1342 = vrot.lane.b32.xlu0 %v454, 28
          %v1343 = vpop.permute.xlu0 %1342
          %1344 = vrot.lane.b32.xlu0 %v455, 28
          %v1345 = vpop.permute.xlu0 %1344
          %1346 = vrot.lane.b32.xlu0 %v456, 28
          %v1347 = vpop.permute.xlu0 %1346
          %1348 = vrot.lane.b32.xlu0 %v457, 28
          %v1349 = vpop.permute.xlu0 %1348
          %1350 = vrot.lane.b32.xlu0 %v458, 28
          %v1351 = vpop.permute.xlu0 %1350
          %1352 = vrot.lane.b32.xlu0 %v459, 28
          %v1353 = vpop.permute.xlu0 %1352
          %1354 = vrot.lane.b32.xlu0 %v460, 28
          %v1355 = vpop.permute.xlu0 %1354
          %1356 = vrot.lane.b32.xlu0 %v461, 28
          %v1357 = vpop.permute.xlu0 %1356
          %1422 = vrot.lane.b32.xlu0 %v462, 32
          %v1423 = vpop.permute.xlu0 %1422
          %1424 = vrot.lane.b32.xlu0 %v463, 32
          %v1425 = vpop.permute.xlu0 %1424
          %1426 = vrot.lane.b32.xlu0 %v464, 32
          %v1427 = vpop.permute.xlu0 %1426
          %1428 = vrot.lane.b32.xlu0 %v465, 32
          %v1429 = vpop.permute.xlu0 %1428
          %1430 = vrot.lane.b32.xlu0 %v466, 32
          %v1431 = vpop.permute.xlu0 %1430
          %1432 = vrot.lane.b32.xlu0 %v467, 32
          %v1433 = vpop.permute.xlu0 %1432
          %1434 = vrot.lane.b32.xlu0 %v468, 32
          %v1435 = vpop.permute.xlu0 %1434
          %1436 = vrot.lane.b32.xlu0 %v469, 32
          %v1437 = vpop.permute.xlu0 %1436
          %1438 = vrot.lane.b32.xlu0 %v470, 32
          %v1439 = vpop.permute.xlu0 %1438
          %1440 = vrot.lane.b32.xlu0 %v471, 32
          %v1441 = vpop.permute.xlu0 %1440
          %1442 = vrot.lane.b32.xlu0 %v472, 32
          %v1443 = vpop.permute.xlu0 %1442
          %1444 = vrot.lane.b32.xlu0 %v473, 32
          %v1445 = vpop.permute.xlu0 %1444
          %1446 = vrot.lane.b32.xlu0 %v474, 32
          %v1447 = vpop.permute.xlu0 %1446
          %1448 = vrot.lane.b32.xlu0 %v475, 32
          %v1449 = vpop.permute.xlu0 %1448
          %1450 = vrot.lane.b32.xlu0 %v476, 32
          %v1451 = vpop.permute.xlu0 %1450
          %1452 = vrot.lane.b32.xlu0 %v477, 32
          %v1453 = vpop.permute.xlu0 %1452
          %1454 = vrot.lane.b32.xlu0 %v478, 32
          %v1455 = vpop.permute.xlu0 %1454
          %1456 = vrot.lane.b32.xlu0 %v479, 32
          %v1457 = vpop.permute.xlu0 %1456
          %1458 = vrot.lane.b32.xlu0 %v480, 32
          %v1459 = vpop.permute.xlu0 %1458
          %1460 = vrot.lane.b32.xlu0 %v481, 32
          %v1461 = vpop.permute.xlu0 %1460
          %1462 = vrot.lane.b32.xlu0 %v482, 32
          %v1463 = vpop.permute.xlu0 %1462
          %1464 = vrot.lane.b32.xlu0 %v483, 32
          %v1465 = vpop.permute.xlu0 %1464
          %1466 = vrot.lane.b32.xlu0 %v484, 32
          %v1467 = vpop.permute.xlu0 %1466
          %1468 = vrot.lane.b32.xlu0 %v485, 32
          %v1469 = vpop.permute.xlu0 %1468
          %1470 = vrot.lane.b32.xlu0 %v486, 32
          %v1471 = vpop.permute.xlu0 %1470
          %1472 = vrot.lane.b32.xlu0 %v487, 32
          %v1473 = vpop.permute.xlu0 %1472
          %1474 = vrot.lane.b32.xlu0 %v488, 32
          %v1475 = vpop.permute.xlu0 %1474
          %1476 = vrot.lane.b32.xlu0 %v489, 32
          %v1477 = vpop.permute.xlu0 %1476
          %1478 = vrot.lane.b32.xlu0 %v490, 32
          %v1479 = vpop.permute.xlu0 %1478
          %1480 = vrot.lane.b32.xlu0 %v491, 32
          %v1481 = vpop.permute.xlu0 %1480
          %1482 = vrot.lane.b32.xlu0 %v492, 32
          %v1483 = vpop.permute.xlu0 %1482
          %1484 = vrot.lane.b32.xlu0 %v493, 32
          %v1485 = vpop.permute.xlu0 %1484
          %vm1518 = vcmask 31744
          %v1519 = vsel %vm1518, %v200, %v527
          %v1520 = vsel %vm1518, %v201, %v529
          %v1521 = vsel %vm1518, %v202, %v531
          %v1522 = vsel %vm1518, %v203, %v533
          %v1523 = vsel %vm1518, %v204, %v535
          %v1524 = vsel %vm1518, %v205, %v537
          %v1525 = vsel %vm1518, %v206, %v539
          %v1526 = vsel %vm1518, %v207, %v541
          %v1527 = vsel %vm1518, %v208, %v543
          %v1528 = vsel %vm1518, %v209, %v545
          %v1529 = vsel %vm1518, %v210, %v547
          %v1530 = vsel %vm1518, %v211, %v549
          %v1531 = vsel %vm1518, %v212, %v551
          %v1532 = vsel %vm1518, %v213, %v553
          %v1533 = vsel %vm1518, %v214, %v555
          %v1534 = vsel %vm1518, %v215, %v557
          %v1535 = vsel %vm1518, %v216, %v559
          %v1536 = vsel %vm1518, %v217, %v561
          %v1537 = vsel %vm1518, %v218, %v563
          %v1538 = vsel %vm1518, %v219, %v565
          %v1539 = vsel %vm1518, %v220, %v567
          %v1540 = vsel %vm1518, %v221, %v569
          %v1541 = vsel %vm1518, %v222, %v571
          %v1542 = vsel %vm1518, %v223, %v573
          %v1543 = vsel %vm1518, %v224, %v575
          %v1544 = vsel %vm1518, %v225, %v577
          %v1545 = vsel %vm1518, %v226, %v579
          %v1546 = vsel %vm1518, %v227, %v581
          %v1547 = vsel %vm1518, %v228, %v583
          %v1548 = vsel %vm1518, %v229, %v585
          %v1549 = vsel %vm1518, %v230, %v587
          %v1550 = vsel %vm1518, %v231, %v589
          %vm1551 = vcmask 64512
          %v1552 = vsel %vm1551, %v1519, %v655
          %v1553 = vsel %vm1551, %v1520, %v657
          %v1554 = vsel %vm1551, %v1521, %v659
          %v1555 = vsel %vm1551, %v1522, %v661
          %v1556 = vsel %vm1551, %v1523, %v663
          %v1557 = vsel %vm1551, %v1524, %v665
          %v1558 = vsel %vm1551, %v1525, %v667
          %v1559 = vsel %vm1551, %v1526, %v669
          %v1560 = vsel %vm1551, %v1527, %v671
          %v1561 = vsel %vm1551, %v1528, %v673
          %v1562 = vsel %vm1551, %v1529, %v675
          %v1563 = vsel %vm1551, %v1530, %v677
          %v1564 = vsel %vm1551, %v1531, %v679
          %v1565 = vsel %vm1551, %v1532, %v681
          %v1566 = vsel %vm1551, %v1533, %v683
          %v1567 = vsel %vm1551, %v1534, %v685
          %v1568 = vsel %vm1551, %v1535, %v687
          %v1569 = vsel %vm1551, %v1536, %v689
          %v1570 = vsel %vm1551, %v1537, %v691
          %v1571 = vsel %vm1551, %v1538, %v693
          %v1572 = vsel %vm1551, %v1539, %v695
          %v1573 = vsel %vm1551, %v1540, %v697
          %v1574 = vsel %vm1551, %v1541, %v699
          %v1575 = vsel %vm1551, %v1542, %v701
          %v1576 = vsel %vm1551, %v1543, %v703
          %v1577 = vsel %vm1551, %v1544, %v705
          %v1578 = vsel %vm1551, %v1545, %v707
          %v1579 = vsel %vm1551, %v1546, %v709
          %v1580 = vsel %vm1551, %v1547, %v711
          %v1581 = vsel %vm1551, %v1548, %v713
          %v1582 = vsel %vm1551, %v1549, %v715
          %v1583 = vsel %vm1551, %v1550, %v717
          %vm1584 = vcmask 97280
          %v1585 = vsel %vm1584, %v1552, %v783
          %v1586 = vsel %vm1584, %v1553, %v785
          %v1587 = vsel %vm1584, %v1554, %v787
          %v1588 = vsel %vm1584, %v1555, %v789
          %v1589 = vsel %vm1584, %v1556, %v791
          %v1590 = vsel %vm1584, %v1557, %v793
          %v1591 = vsel %vm1584, %v1558, %v795
          %v1592 = vsel %vm1584, %v1559, %v797
          %v1593 = vsel %vm1584, %v1560, %v799
          %v1594 = vsel %vm1584, %v1561, %v801
          %v1595 = vsel %vm1584, %v1562, %v803
          %v1596 = vsel %vm1584, %v1563, %v805
          %v1597 = vsel %vm1584, %v1564, %v807
          %v1598 = vsel %vm1584, %v1565, %v809
          %v1599 = vsel %vm1584, %v1566, %v811
          %v1600 = vsel %vm1584, %v1567, %v813
          %v1601 = vsel %vm1584, %v1568, %v815
          %v1602 = vsel %vm1584, %v1569, %v817
          %v1603 = vsel %vm1584, %v1570, %v819
          %v1604 = vsel %vm1584, %v1571, %v821
          %v1605 = vsel %vm1584, %v1572, %v823
          %v1606 = vsel %vm1584, %v1573, %v825
          %v1607 = vsel %vm1584, %v1574, %v827
          %v1608 = vsel %vm1584, %v1575, %v829
          %v1609 = vsel %vm1584, %v1576, %v831
          %v1610 = vsel %vm1584, %v1577, %v833
          %v1611 = vsel %vm1584, %v1578, %v835
          %v1612 = vsel %vm1584, %v1579, %v837
          %v1613 = vsel %vm1584, %v1580, %v839
          %v1614 = vsel %vm1584, %v1581, %v841
          %v1615 = vsel %vm1584, %v1582, %v843
          %v1616 = vsel %vm1584, %v1583, %v845
          %vm1617 = vcmask 130048
          %v1618 = vsel %vm1617, %v1585, %v911
          %v1619 = vsel %vm1617, %v1586, %v913
          %v1620 = vsel %vm1617, %v1587, %v915
          %v1621 = vsel %vm1617, %v1588, %v917
          %v1622 = vsel %vm1617, %v1589, %v919
          %v1623 = vsel %vm1617, %v1590, %v921
          %v1624 = vsel %vm1617, %v1591, %v923
          %v1625 = vsel %vm1617, %v1592, %v925
          %v1626 = vsel %vm1617, %v1593, %v927
          %v1627 = vsel %vm1617, %v1594, %v929
          %v1628 = vsel %vm1617, %v1595, %v931
          %v1629 = vsel %vm1617, %v1596, %v933
          %v1630 = vsel %vm1617, %v1597, %v935
          %v1631 = vsel %vm1617, %v1598, %v937
          %v1632 = vsel %vm1617, %v1599, %v939
          %v1633 = vsel %vm1617, %v1600, %v941
          %v1634 = vsel %vm1617, %v1601, %v943
          %v1635 = vsel %vm1617, %v1602, %v945
          %v1636 = vsel %vm1617, %v1603, %v947
          %v1637 = vsel %vm1617, %v1604, %v949
          %v1638 = vsel %vm1617, %v1605, %v951
          %v1639 = vsel %vm1617, %v1606, %v953
          %v1640 = vsel %vm1617, %v1607, %v955
          %v1641 = vsel %vm1617, %v1608, %v957
          %v1642 = vsel %vm1617, %v1609, %v959
          %v1643 = vsel %vm1617, %v1610, %v961
          %v1644 = vsel %vm1617, %v1611, %v963
          %v1645 = vsel %vm1617, %v1612, %v965
          %v1646 = vsel %vm1617, %v1613, %v967
          %v1647 = vsel %vm1617, %v1614, %v969
          %v1648 = vsel %vm1617, %v1615, %v971
          %v1649 = vsel %vm1617, %v1616, %v973
          %vm1650 = vcmask 162816
          %v1651 = vsel %vm1650, %v1618, %v1039
          %v1652 = vsel %vm1650, %v1619, %v1041
          %v1653 = vsel %vm1650, %v1620, %v1043
          %v1654 = vsel %vm1650, %v1621, %v1045
          %v1655 = vsel %vm1650, %v1622, %v1047
          %v1656 = vsel %vm1650, %v1623, %v1049
          %v1657 = vsel %vm1650, %v1624, %v1051
          %v1658 = vsel %vm1650, %v1625, %v1053
          %v1659 = vsel %vm1650, %v1626, %v1055
          %v1660 = vsel %vm1650, %v1627, %v1057
          %v1661 = vsel %vm1650, %v1628, %v1059
          %v1662 = vsel %vm1650, %v1629, %v1061
          %v1663 = vsel %vm1650, %v1630, %v1063
          %v1664 = vsel %vm1650, %v1631, %v1065
          %v1665 = vsel %vm1650, %v1632, %v1067
          %v1666 = vsel %vm1650, %v1633, %v1069
          %v1667 = vsel %vm1650, %v1634, %v1071
          %v1668 = vsel %vm1650, %v1635, %v1073
          %v1669 = vsel %vm1650, %v1636, %v1075
          %v1670 = vsel %vm1650, %v1637, %v1077
          %v1671 = vsel %vm1650, %v1638, %v1079
          %v1672 = vsel %vm1650, %v1639, %v1081
          %v1673 = vsel %vm1650, %v1640, %v1083
          %v1674 = vsel %vm1650, %v1641, %v1085
          %v1675 = vsel %vm1650, %v1642, %v1087
          %v1676 = vsel %vm1650, %v1643, %v1089
          %v1677 = vsel %vm1650, %v1644, %v1091
          %v1678 = vsel %vm1650, %v1645, %v1093
          %v1679 = vsel %vm1650, %v1646, %v1095
          %v1680 = vsel %vm1650, %v1647, %v1097
          %v1681 = vsel %vm1650, %v1648, %v1099
          %v1682 = vsel %vm1650, %v1649, %v1101
          %vm1683 = vcmask 195584
          %v1684 = vsel %vm1683, %v1651, %v1167
          %v1685 = vsel %vm1683, %v1652, %v1169
          %v1686 = vsel %vm1683, %v1653, %v1171
          %v1687 = vsel %vm1683, %v1654, %v1173
          %v1688 = vsel %vm1683, %v1655, %v1175
          %v1689 = vsel %vm1683, %v1656, %v1177
          %v1690 = vsel %vm1683, %v1657, %v1179
          %v1691 = vsel %vm1683, %v1658, %v1181
          %v1692 = vsel %vm1683, %v1659, %v1183
          %v1693 = vsel %vm1683, %v1660, %v1185
          %v1694 = vsel %vm1683, %v1661, %v1187
          %v1695 = vsel %vm1683, %v1662, %v1189
          %v1696 = vsel %vm1683, %v1663, %v1191
          %v1697 = vsel %vm1683, %v1664, %v1193
          %v1698 = vsel %vm1683, %v1665, %v1195
          %v1699 = vsel %vm1683, %v1666, %v1197
          %v1700 = vsel %vm1683, %v1667, %v1199
          %v1701 = vsel %vm1683, %v1668, %v1201
          %v1702 = vsel %vm1683, %v1669, %v1203
          %v1703 = vsel %vm1683, %v1670, %v1205
          %v1704 = vsel %vm1683, %v1671, %v1207
          %v1705 = vsel %vm1683, %v1672, %v1209
          %v1706 = vsel %vm1683, %v1673, %v1211
          %v1707 = vsel %vm1683, %v1674, %v1213
          %v1708 = vsel %vm1683, %v1675, %v1215
          %v1709 = vsel %vm1683, %v1676, %v1217
          %v1710 = vsel %vm1683, %v1677, %v1219
          %v1711 = vsel %vm1683, %v1678, %v1221
          %v1712 = vsel %vm1683, %v1679, %v1223
          %v1713 = vsel %vm1683, %v1680, %v1225
          %v1714 = vsel %vm1683, %v1681, %v1227
          %v1715 = vsel %vm1683, %v1682, %v1229
          %vm1716 = vcmask 228352
          %v1717 = vsel %vm1716, %v1684, %v1295
          %v1718 = vsel %vm1716, %v1685, %v1297
          %v1719 = vsel %vm1716, %v1686, %v1299
          %v1720 = vsel %vm1716, %v1687, %v1301
          %v1721 = vsel %vm1716, %v1688, %v1303
          %v1722 = vsel %vm1716, %v1689, %v1305
          %v1723 = vsel %vm1716, %v1690, %v1307
          %v1724 = vsel %vm1716, %v1691, %v1309
          %v1725 = vsel %vm1716, %v1692, %v1311
          %v1726 = vsel %vm1716, %v1693, %v1313
          %v1727 = vsel %vm1716, %v1694, %v1315
          %v1728 = vsel %vm1716, %v1695, %v1317
          %v1729 = vsel %vm1716, %v1696, %v1319
          %v1730 = vsel %vm1716, %v1697, %v1321
          %v1731 = vsel %vm1716, %v1698, %v1323
          %v1732 = vsel %vm1716, %v1699, %v1325
          %v1733 = vsel %vm1716, %v1700, %v1327
          %v1734 = vsel %vm1716, %v1701, %v1329
          %v1735 = vsel %vm1716, %v1702, %v1331
          %v1736 = vsel %vm1716, %v1703, %v1333
          %v1737 = vsel %vm1716, %v1704, %v1335
          %v1738 = vsel %vm1716, %v1705, %v1337
          %v1739 = vsel %vm1716, %v1706, %v1339
          %v1740 = vsel %vm1716, %v1707, %v1341
          %v1741 = vsel %vm1716, %v1708, %v1343
          %v1742 = vsel %vm1716, %v1709, %v1345
          %v1743 = vsel %vm1716, %v1710, %v1347
          %v1744 = vsel %vm1716, %v1711, %v1349
          %v1745 = vsel %vm1716, %v1712, %v1351
          %v1746 = vsel %vm1716, %v1713, %v1353
          %v1747 = vsel %vm1716, %v1714, %v1355
          %v1748 = vsel %vm1716, %v1715, %v1357
          %vm1749 = vcmask 261120
          %v1750 = vsel %vm1749, %v1717, %v1423
          %v1751 = vsel %vm1749, %v1718, %v1425
          %v1752 = vsel %vm1749, %v1719, %v1427
          %v1753 = vsel %vm1749, %v1720, %v1429
          %v1754 = vsel %vm1749, %v1721, %v1431
          %v1755 = vsel %vm1749, %v1722, %v1433
          %v1756 = vsel %vm1749, %v1723, %v1435
          %v1757 = vsel %vm1749, %v1724, %v1437
          %v1758 = vsel %vm1749, %v1725, %v1439
          %v1759 = vsel %vm1749, %v1726, %v1441
          %v1760 = vsel %vm1749, %v1727, %v1443
          %v1761 = vsel %vm1749, %v1728, %v1445
          %v1762 = vsel %vm1749, %v1729, %v1447
          %v1763 = vsel %vm1749, %v1730, %v1449
          %v1764 = vsel %vm1749, %v1731, %v1451
          %v1765 = vsel %vm1749, %v1732, %v1453
          %v1766 = vsel %vm1749, %v1733, %v1455
          %v1767 = vsel %vm1749, %v1734, %v1457
          %v1768 = vsel %vm1749, %v1735, %v1459
          %v1769 = vsel %vm1749, %v1736, %v1461
          %v1770 = vsel %vm1749, %v1737, %v1463
          %v1771 = vsel %vm1749, %v1738, %v1465
          %v1772 = vsel %vm1749, %v1739, %v1467
          %v1773 = vsel %vm1749, %v1740, %v1469
          %v1774 = vsel %vm1749, %v1741, %v1471
          %v1775 = vsel %vm1749, %v1742, %v1473
          %v1776 = vsel %vm1749, %v1743, %v1475
          %v1777 = vsel %vm1749, %v1744, %v1477
          %v1778 = vsel %vm1749, %v1745, %v1479
          %v1779 = vsel %vm1749, %v1746, %v1481
          %v1780 = vsel %vm1749, %v1747, %v1483
          %v1781 = vsel %vm1749, %v1748, %v1485
          %vm1782 = vcmask 293888
          %1783 = vst.msk [vmem:[#allocation2] sm:$0xff] %vm1782, %v1750
          %1784 = vst.msk [vmem:[#allocation2 + $0x8] sm:$0xff] %vm1782, %v1751
          %1785 = vst.msk [vmem:[#allocation2 + $0x10] sm:$0xff] %vm1782, %v1752
          %1786 = vst.msk [vmem:[#allocation2 + $0x18] sm:$0xff] %vm1782, %v1753
          %1787 = vst.msk [vmem:[#allocation2 + $0x20] sm:$0xff] %vm1782, %v1754
          %1788 = vst.msk [vmem:[#allocation2 + $0x28] sm:$0xff] %vm1782, %v1755
          %1789 = vst.msk [vmem:[#allocation2 + $0x30] sm:$0xff] %vm1782, %v1756
          %1790 = vst.msk [vmem:[#allocation2 + $0x38] sm:$0xff] %vm1782, %v1757
          %1791 = vst.msk [vmem:[#allocation2 + $0x40] sm:$0xff] %vm1782, %v1758
          %1792 = vst.msk [vmem:[#allocation2 + $0x48] sm:$0xff] %vm1782, %v1759
          %1793 = vst.msk [vmem:[#allocation2 + $0x50] sm:$0xff] %vm1782, %v1760
          %1794 = vst.msk [vmem:[#allocation2 + $0x58] sm:$0xff] %vm1782, %v1761
          %1795 = vst.msk [vmem:[#allocation2 + $0x60] sm:$0xff] %vm1782, %v1762
          %1796 = vst.msk [vmem:[#allocation2 + $0x68] sm:$0xff] %vm1782, %v1763
          %1797 = vst.msk [vmem:[#allocation2 + $0x70] sm:$0xff] %vm1782, %v1764
          %1798 = vst.msk [vmem:[#allocation2 + $0x78] sm:$0xff] %vm1782, %v1765
          %1799 = vst.msk [vmem:[#allocation2 + $0x80] sm:$0xff] %vm1782, %v1766
          %1800 = vst.msk [vmem:[#allocation2 + $0x88] sm:$0xff] %vm1782, %v1767
          %1801 = vst.msk [vmem:[#allocation2 + $0x90] sm:$0xff] %vm1782, %v1768
          %1802 = vst.msk [vmem:[#allocation2 + $0x98] sm:$0xff] %vm1782, %v1769
          %1803 = vst.msk [vmem:[#allocation2 + $0xa0] sm:$0xff] %vm1782, %v1770
          %1804 = vst.msk [vmem:[#allocation2 + $0xa8] sm:$0xff] %vm1782, %v1771
          %1805 = vst.msk [vmem:[#allocation2 + $0xb0] sm:$0xff] %vm1782, %v1772
          %1806 = vst.msk [vmem:[#allocation2 + $0xb8] sm:$0xff] %vm1782, %v1773
          %1807 = vst.msk [vmem:[#allocation2 + $0xc0] sm:$0xff] %vm1782, %v1774
          %1808 = vst.msk [vmem:[#allocation2 + $0xc8] sm:$0xff] %vm1782, %v1775
          %1809 = vst.msk [vmem:[#allocation2 + $0xd0] sm:$0xff] %vm1782, %v1776
          %1810 = vst.msk [vmem:[#allocation2 + $0xd8] sm:$0xff] %vm1782, %v1777
          %1811 = vst.msk [vmem:[#allocation2 + $0xe0] sm:$0xff] %vm1782, %v1778
          %1812 = vst.msk [vmem:[#allocation2 + $0xe8] sm:$0xff] %vm1782, %v1779
          %1813 = vst.msk [vmem:[#allocation2 + $0xf0] sm:$0xff] %vm1782, %v1780
          %1814 = vst.msk [vmem:[#allocation2 + $0xf8] sm:$0xff] %vm1782, %v1781
        $region36: #{tpu_custom_call.1} parent=31 // pred_fallthru
          _
        %s1815 = smul.u32 %s24, 40
        %s1816 = scalar_lea.vmem %s1, %s1815
        %v1817 = vld [vmem:[%s1816] sm:$0xff]
        %v1818 = vld [vmem:[%s1816 + $0x8] sm:$0xff]
        %v1819 = vld [vmem:[%s1816 + $0x10] sm:$0xff]
        %v1820 = vld [vmem:[%s1816 + $0x18] sm:$0xff]
        %v1821 = vld [vmem:[%s1816 + $0x20] sm:$0xf]
        %s1822 = scalar_lea.vmem %s2, %s24
        %v1823 = vld [vmem:[%s1822] sm:$0x1]
        %v1824 = vld [vmem:[#allocation2] sm:$0xff]
        %v1825 = vld [vmem:[#allocation2 + $0x8] sm:$0xff]
        %v1826 = vld [vmem:[#allocation2 + $0x10] sm:$0xff]
        %v1827 = vld [vmem:[#allocation2 + $0x18] sm:$0xff]
        %v1828 = vld [vmem:[#allocation2 + $0x20] sm:$0xff]
        %v1829 = vld [vmem:[#allocation2 + $0x28] sm:$0xff]
        %v1830 = vld [vmem:[#allocation2 + $0x30] sm:$0xff]
        %v1831 = vld [vmem:[#allocation2 + $0x38] sm:$0xff]
        %v1832 = vld [vmem:[#allocation2 + $0x40] sm:$0xff]
        %v1833 = vld [vmem:[#allocation2 + $0x48] sm:$0xff]
        %v1834 = vld [vmem:[#allocation2 + $0x50] sm:$0xff]
        %v1835 = vld [vmem:[#allocation2 + $0x58] sm:$0xff]
        %v1836 = vld [vmem:[#allocation2 + $0x60] sm:$0xff]
        %v1837 = vld [vmem:[#allocation2 + $0x68] sm:$0xff]
        %v1838 = vld [vmem:[#allocation2 + $0x70] sm:$0xff]
        %v1839 = vld [vmem:[#allocation2 + $0x78] sm:$0xff]
        %v1840 = vld [vmem:[#allocation2 + $0x80] sm:$0xff]
        %v1841 = vld [vmem:[#allocation2 + $0x88] sm:$0xff]
        %v1842 = vld [vmem:[#allocation2 + $0x90] sm:$0xff]
        %v1843 = vld [vmem:[#allocation2 + $0x98] sm:$0xff]
        %v1844 = vld [vmem:[#allocation2 + $0xa0] sm:$0xff]
        %v1845 = vld [vmem:[#allocation2 + $0xa8] sm:$0xff]
        %v1846 = vld [vmem:[#allocation2 + $0xb0] sm:$0xff]
        %v1847 = vld [vmem:[#allocation2 + $0xb8] sm:$0xff]
        %v1848 = vld [vmem:[#allocation2 + $0xc0] sm:$0xff]
        %v1849 = vld [vmem:[#allocation2 + $0xc8] sm:$0xff]
        %v1850 = vld [vmem:[#allocation2 + $0xd0] sm:$0xff]
        %v1851 = vld [vmem:[#allocation2 + $0xd8] sm:$0xff]
        %v1852 = vld [vmem:[#allocation2 + $0xe0] sm:$0xff]
        %v1853 = vld [vmem:[#allocation2 + $0xe8] sm:$0xff]
        %v1854 = vld [vmem:[#allocation2 + $0xf0] sm:$0xff]
        %v1855 = vld [vmem:[#allocation2 + $0xf8] sm:$0xff]
        %v1857 = vlaneseq
        %v1858 = vshrl.u32 %v1857, 7
        %v1859 = vsub.s32 0, %v1858
        %v1860 = vrot.slane %v1823, %v1859
        %vm1862 = vcmask 293888
        %v1864 = vsel %vm1862, %v1824, 0
        %v1867 = vsel %vm1862, %v1825, 0
        %v1870 = vsel %vm1862, %v1826, 0
        %v1873 = vsel %vm1862, %v1827, 0
        %v1876 = vsel %vm1862, %v1828, 0
        %v1879 = vsel %vm1862, %v1829, 0
        %v1882 = vsel %vm1862, %v1830, 0
        %v1885 = vsel %vm1862, %v1831, 0
        %v1888 = vsel %vm1862, %v1832, 0
        %v1891 = vsel %vm1862, %v1833, 0
        %v1894 = vsel %vm1862, %v1834, 0
        %v1897 = vsel %vm1862, %v1835, 0
        %v1900 = vsel %vm1862, %v1836, 0
        %v1903 = vsel %vm1862, %v1837, 0
        %v1906 = vsel %vm1862, %v1838, 0
        %v1909 = vsel %vm1862, %v1839, 0
        %v1912 = vsel %vm1862, %v1840, 0
        %v1915 = vsel %vm1862, %v1841, 0
        %v1918 = vsel %vm1862, %v1842, 0
        %v1921 = vsel %vm1862, %v1843, 0
        %v1924 = vsel %vm1862, %v1844, 0
        %v1927 = vsel %vm1862, %v1845, 0
        %v1930 = vsel %vm1862, %v1846, 0
        %v1933 = vsel %vm1862, %v1847, 0
        %v1936 = vsel %vm1862, %v1848, 0
        %v1939 = vsel %vm1862, %v1849, 0
        %v1942 = vsel %vm1862, %v1850, 0
        %v1945 = vsel %vm1862, %v1851, 0
        %v1948 = vsel %vm1862, %v1852, 0
        %v1951 = vsel %vm1862, %v1853, 0
        %v1954 = vsel %vm1862, %v1854, 0
        %v1957 = vsel %vm1862, %v1855, 0
        %vm1959 = vcmask 1043456
        %v1961 = vsel %vm1959, %v1821, 0
        %1963 = vmatprep.subr.mxu0 0.0
        %1964 = vmatpush1.msra.mxu0 %v1817
        %1965 = vmatprep.subr.mxu0 0.0
        %1966 = vmatpush1.msra.mxu0 %v1818
        %1967 = vmatprep.subr.mxu0 0.0
        %1968 = vmatpush1.msra.mxu0 %v1819
        %1969 = vmatprep.subr.mxu0 0.0
        %1970 = vmatpush1.msra.mxu0 %v1820
        %1971 = vmatprep.subr.mxu0 0.0
        %1972 = vmatpush1.msra.mxu0 %v1961
        %1973 = vmatprep.subr.mxu0 0.0
        %1974 = vmatpush1.msra.mxu0 0.0
        %1975 = vmatprep.subr.mxu0 0.0
        %1976 = vmatpush1.msra.mxu0 0.0
        %1977 = vmatprep.subr.mxu0 0.0
        %1978 = vmatpush1.msra.mxu0 0.0
        %1979 = vmatprep.subr.mxu0 0.0
        %1980 = vmatpush1.msra.mxu0 0.0
        %1981 = vmatprep.subr.mxu0 0.0
        %1982 = vmatpush1.msra.mxu0 0.0
        %1983 = vmatprep.subr.mxu0 0.0
        %1984 = vmatpush1.msra.mxu0 0.0
        %1985 = vmatprep.subr.mxu0 0.0
        %1986 = vmatpush1.msra.mxu0 0.0
        %1987 = vmatprep.subr.mxu0 0.0
        %1988 = vmatpush1.msra.mxu0 0.0
        %1989 = vmatprep.subr.mxu0 0.0
        %1990 = vmatpush1.msra.mxu0 0.0
        %1991 = vmatprep.subr.mxu0 0.0
        %1992 = vmatpush1.msra.mxu0 0.0
        %1993 = vmatprep.subr.mxu0 0.0
        %1994 = vmatpush1.msra.mxu0 0.0
        %1995 = vmatprep.subr.mxu0 0.0
        %1996 = vmatpush1.msra.mxu0 0.0
        %1997 = vmatprep.subr.mxu0 0.0
        %1998 = vmatpush1.msra.mxu0 0.0
        %1999 = vmatprep.subr.mxu0 0.0
        %2000 = vmatpush1.msra.mxu0 0.0
        %2001 = vmatprep.subr.mxu0 0.0
        %2002 = vmatpush1.msra.mxu0 0.0
        %2003 = vmatprep.subr.mxu0 0.0
        %2004 = vmatpush1.msra.mxu0 0.0
        %2005 = vmatprep.subr.mxu0 0.0
        %2006 = vmatpush1.msra.mxu0 0.0
        %2007 = vmatprep.subr.mxu0 0.0
        %2008 = vmatpush1.msra.mxu0 0.0
        %2009 = vmatprep.subr.mxu0 0.0
        %2010 = vmatpush1.msra.mxu0 0.0
        %2011 = vmatprep.subr.mxu0 0.0
        %2012 = vmatpush1.msra.mxu0 0.0
        %2013 = vmatprep.subr.mxu0 0.0
        %2014 = vmatpush1.msra.mxu0 0.0
        %2015 = vmatprep.subr.mxu0 0.0
        %2016 = vmatpush1.msra.mxu0 0.0
        %2017 = vmatprep.subr.mxu0 0.0
        %2018 = vmatpush1.msra.mxu0 0.0
        %2019 = vmatprep.subr.mxu0 0.0
        %2020 = vmatpush1.msra.mxu0 0.0
        %2021 = vmatprep.subr.mxu0 0.0
        %2022 = vmatpush1.msra.mxu0 0.0
        %2023 = vmatprep.subr.mxu0 0.0
        %2024 = vmatpush1.msra.mxu0 0.0
        %2025 = vmatprep.subr.mxu0 0.0
        %2026 = vmatpush1.msra.mxu0 0.0
        %2027 = vmatprep.mubr.f32.mxu0 0.0
        %2028 = vmatmul.mubr.f32.gmra.mrb[0].mxu0 %v1864
        %v2029 = vpop.f32.mrb[0].mxu0
        %v2030 = vadd.f32 %v1860, %v2029
        %v2031 = vpop.f32.mrb[0].mxu0
        %2032 = vmatprep.mubr.f32.mxu0 0.0
        %2033 = vmatmul.mubr.f32.gmra.mrb[0].mxu0 %v1867
        %v2034 = vpop.f32.mrb[0].mxu0
        %v2035 = vadd.f32 %v1860, %v2034
        %v2036 = vpop.f32.mrb[0].mxu0
        %2037 = vmatprep.mubr.f32.mxu0 0.0
        %2038 = vmatmul.mubr.f32.gmra.mrb[0].mxu0 %v1870
        %v2039 = vpop.f32.mrb[0].mxu0
        %v2040 = vadd.f32 %v1860, %v2039
        %v2041 = vpop.f32.mrb[0].mxu0
        %2042 = vmatprep.mubr.f32.mxu0 0.0
        %2043 = vmatmul.mubr.f32.gmra.mrb[0].mxu0 %v1873
        %v2044 = vpop.f32.mrb[0].mxu0
        %v2045 = vadd.f32 %v1860, %v2044
        %v2046 = vpop.f32.mrb[0].mxu0
        %2047 = vmatprep.mubr.f32.mxu0 0.0
        %2048 = vmatmul.mubr.f32.gmra.mrb[0].mxu0 %v1876
        %v2049 = vpop.f32.mrb[0].mxu0
        %v2050 = vadd.f32 %v1860, %v2049
        %v2051 = vpop.f32.mrb[0].mxu0
        %2052 = vmatprep.mubr.f32.mxu0 0.0
        %2053 = vmatmul.mubr.f32.gmra.mrb[0].mxu0 %v1879
        %v2054 = vpop.f32.mrb[0].mxu0
        %v2055 = vadd.f32 %v1860, %v2054
        %v2056 = vpop.f32.mrb[0].mxu0
        %2057 = vmatprep.mubr.f32.mxu0 0.0
        %2058 = vmatmul.mubr.f32.gmra.mrb[0].mxu0 %v1882
        %v2059 = vpop.f32.mrb[0].mxu0
        %v2060 = vadd.f32 %v1860, %v2059
        %v2061 = vpop.f32.mrb[0].mxu0
        %2062 = vmatprep.mubr.f32.mxu0 0.0
        %2063 = vmatmul.mubr.f32.gmra.mrb[0].mxu0 %v1885
        %v2064 = vpop.f32.mrb[0].mxu0
        %v2065 = vadd.f32 %v1860, %v2064
        %v2066 = vpop.f32.mrb[0].mxu0
        %2067 = vmatprep.mubr.f32.mxu0 0.0
        %2068 = vmatmul.mubr.f32.gmra.mrb[0].mxu0 %v1888
        %v2069 = vpop.f32.mrb[0].mxu0
        %v2070 = vadd.f32 %v1860, %v2069
        %v2071 = vpop.f32.mrb[0].mxu0
        %2072 = vmatprep.mubr.f32.mxu0 0.0
        %2073 = vmatmul.mubr.f32.gmra.mrb[0].mxu0 %v1891
        %v2074 = vpop.f32.mrb[0].mxu0
        %v2075 = vadd.f32 %v1860, %v2074
        %v2076 = vpop.f32.mrb[0].mxu0
        %2077 = vmatprep.mubr.f32.mxu0 0.0
        %2078 = vmatmul.mubr.f32.gmra.mrb[0].mxu0 %v1894
        %v2079 = vpop.f32.mrb[0].mxu0
        %v2080 = vadd.f32 %v1860, %v2079
        %v2081 = vpop.f32.mrb[0].mxu0
        %2082 = vmatprep.mubr.f32.mxu0 0.0
        %2083 = vmatmul.mubr.f32.gmra.mrb[0].mxu0 %v1897
        %v2084 = vpop.f32.mrb[0].mxu0
        %v2085 = vadd.f32 %v1860, %v2084
        %v2086 = vpop.f32.mrb[0].mxu0
        %2087 = vmatprep.mubr.f32.mxu0 0.0
        %2088 = vmatmul.mubr.f32.gmra.mrb[0].mxu0 %v1900
        %v2089 = vpop.f32.mrb[0].mxu0
        %v2090 = vadd.f32 %v1860, %v2089
        %v2091 = vpop.f32.mrb[0].mxu0
        %2092 = vmatprep.mubr.f32.mxu0 0.0
        %2093 = vmatmul.mubr.f32.gmra.mrb[0].mxu0 %v1903
        %v2094 = vpop.f32.mrb[0].mxu0
        %v2095 = vadd.f32 %v1860, %v2094
        %v2096 = vpop.f32.mrb[0].mxu0
        %2097 = vmatprep.mubr.f32.mxu0 0.0
        %2098 = vmatmul.mubr.f32.gmra.mrb[0].mxu0 %v1906
        %v2099 = vpop.f32.mrb[0].mxu0
        %v2100 = vadd.f32 %v1860, %v2099
        %v2101 = vpop.f32.mrb[0].mxu0
        %2102 = vmatprep.mubr.f32.mxu0 0.0
        %2103 = vmatmul.mubr.f32.gmra.mrb[0].mxu0 %v1909
        %v2104 = vpop.f32.mrb[0].mxu0
        %v2105 = vadd.f32 %v1860, %v2104
        %v2106 = vpop.f32.mrb[0].mxu0
        %2107 = vmatprep.mubr.f32.mxu0 0.0
        %2108 = vmatmul.mubr.f32.gmra.mrb[0].mxu0 %v1912
        %v2109 = vpop.f32.mrb[0].mxu0
        %v2110 = vadd.f32 %v1860, %v2109
        %v2111 = vpop.f32.mrb[0].mxu0
        %2112 = vmatprep.mubr.f32.mxu0 0.0
        %2113 = vmatmul.mubr.f32.gmra.mrb[0].mxu0 %v1915
        %v2114 = vpop.f32.mrb[0].mxu0
        %v2115 = vadd.f32 %v1860, %v2114
        %v2116 = vpop.f32.mrb[0].mxu0
        %2117 = vmatprep.mubr.f32.mxu0 0.0
        %2118 = vmatmul.mubr.f32.gmra.mrb[0].mxu0 %v1918
        %v2119 = vpop.f32.mrb[0].mxu0
        %v2120 = vadd.f32 %v1860, %v2119
        %v2121 = vpop.f32.mrb[0].mxu0
        %2122 = vmatprep.mubr.f32.mxu0 0.0
        %2123 = vmatmul.mubr.f32.gmra.mrb[0].mxu0 %v1921
        %v2124 = vpop.f32.mrb[0].mxu0
        %v2125 = vadd.f32 %v1860, %v2124
        %v2126 = vpop.f32.mrb[0].mxu0
        %2127 = vmatprep.mubr.f32.mxu0 0.0
        %2128 = vmatmul.mubr.f32.gmra.mrb[0].mxu0 %v1924
        %v2129 = vpop.f32.mrb[0].mxu0
        %v2130 = vadd.f32 %v1860, %v2129
        %v2131 = vpop.f32.mrb[0].mxu0
        %2132 = vmatprep.mubr.f32.mxu0 0.0
        %2133 = vmatmul.mubr.f32.gmra.mrb[0].mxu0 %v1927
        %v2134 = vpop.f32.mrb[0].mxu0
        %v2135 = vadd.f32 %v1860, %v2134
        %v2136 = vpop.f32.mrb[0].mxu0
        %2137 = vmatprep.mubr.f32.mxu0 0.0
        %2138 = vmatmul.mubr.f32.gmra.mrb[0].mxu0 %v1930
        %v2139 = vpop.f32.mrb[0].mxu0
        %v2140 = vadd.f32 %v1860, %v2139
        %v2141 = vpop.f32.mrb[0].mxu0
        %2142 = vmatprep.mubr.f32.mxu0 0.0
        %2143 = vmatmul.mubr.f32.gmra.mrb[0].mxu0 %v1933
        %v2144 = vpop.f32.mrb[0].mxu0
        %v2145 = vadd.f32 %v1860, %v2144
        %v2146 = vpop.f32.mrb[0].mxu0
        %2147 = vmatprep.mubr.f32.mxu0 0.0
        %2148 = vmatmul.mubr.f32.gmra.mrb[0].mxu0 %v1936
        %v2149 = vpop.f32.mrb[0].mxu0
        %v2150 = vadd.f32 %v1860, %v2149
        %v2151 = vpop.f32.mrb[0].mxu0
        %2152 = vmatprep.mubr.f32.mxu0 0.0
        %2153 = vmatmul.mubr.f32.gmra.mrb[0].mxu0 %v1939
        %v2154 = vpop.f32.mrb[0].mxu0
        %v2155 = vadd.f32 %v1860, %v2154
        %v2156 = vpop.f32.mrb[0].mxu0
        %2157 = vmatprep.mubr.f32.mxu0 0.0
        %2158 = vmatmul.mubr.f32.gmra.mrb[0].mxu0 %v1942
        %v2159 = vpop.f32.mrb[0].mxu0
        %v2160 = vadd.f32 %v1860, %v2159
        %v2161 = vpop.f32.mrb[0].mxu0
        %2162 = vmatprep.mubr.f32.mxu0 0.0
        %2163 = vmatmul.mubr.f32.gmra.mrb[0].mxu0 %v1945
        %v2164 = vpop.f32.mrb[0].mxu0
        %v2165 = vadd.f32 %v1860, %v2164
        %v2166 = vpop.f32.mrb[0].mxu0
        %2167 = vmatprep.mubr.f32.mxu0 0.0
        %2168 = vmatmul.mubr.f32.gmra.mrb[0].mxu0 %v1948
        %v2169 = vpop.f32.mrb[0].mxu0
        %v2170 = vadd.f32 %v1860, %v2169
        %v2171 = vpop.f32.mrb[0].mxu0
        %2172 = vmatprep.mubr.f32.mxu0 0.0
        %2173 = vmatmul.mubr.f32.gmra.mrb[0].mxu0 %v1951
        %v2174 = vpop.f32.mrb[0].mxu0
        %v2175 = vadd.f32 %v1860, %v2174
        %v2176 = vpop.f32.mrb[0].mxu0
        %2177 = vmatprep.mubr.f32.mxu0 0.0
        %2178 = vmatmul.mubr.f32.gmra.mrb[0].mxu0 %v1954
        %v2179 = vpop.f32.mrb[0].mxu0
        %v2180 = vadd.f32 %v1860, %v2179
        %v2181 = vpop.f32.mrb[0].mxu0
        %2182 = vmatprep.mubr.f32.mxu0 0.0
        %2183 = vmatmul.mubr.f32.gmra.mrb[0].mxu0 %v1957
        %v2184 = vpop.f32.mrb[0].mxu0
        %v2185 = vadd.f32 %v1860, %v2184
        %v2186 = vpop.f32.mrb[0].mxu0
        %2187 = vdwg.mxu0
        %v2188 = vmin.f32 %v2030, 20.0
        %v2189 = vmin.f32 %v2035, 20.0
        %v2190 = vmin.f32 %v2040, 20.0
        %v2191 = vmin.f32 %v2045, 20.0
        %v2192 = vmin.f32 %v2050, 20.0
        %v2193 = vmin.f32 %v2055, 20.0
        %v2194 = vmin.f32 %v2060, 20.0
        %v2195 = vmin.f32 %v2065, 20.0
        %v2196 = vmin.f32 %v2070, 20.0
        %v2197 = vmin.f32 %v2075, 20.0
        %v2198 = vmin.f32 %v2080, 20.0
        %v2199 = vmin.f32 %v2085, 20.0
        %v2200 = vmin.f32 %v2090, 20.0
        %v2201 = vmin.f32 %v2095, 20.0
        %v2202 = vmin.f32 %v2100, 20.0
        %v2203 = vmin.f32 %v2105, 20.0
        %v2204 = vmin.f32 %v2110, 20.0
        %v2205 = vmin.f32 %v2115, 20.0
        %v2206 = vmin.f32 %v2120, 20.0
        %v2207 = vmin.f32 %v2125, 20.0
        %v2208 = vmin.f32 %v2130, 20.0
        %v2209 = vmin.f32 %v2135, 20.0
        %v2210 = vmin.f32 %v2140, 20.0
        %v2211 = vmin.f32 %v2145, 20.0
        %v2212 = vmin.f32 %v2150, 20.0
        %v2213 = vmin.f32 %v2155, 20.0
        %v2214 = vmin.f32 %v2160, 20.0
        %v2215 = vmin.f32 %v2165, 20.0
        %v2216 = vmin.f32 %v2170, 20.0
        %v2217 = vmin.f32 %v2175, 20.0
        %v2218 = vmin.f32 %v2180, 20.0
        %v2219 = vmin.f32 %v2185, 20.0
        %v2220 = vmul.f32 %v2188, 1.442695
        %v2221 = vpow.pop %v2220
        %v2222 = vmul.f32 %v2189, 1.442695
        %v2223 = vpow.pop %v2222
        %v2224 = vmul.f32 %v2190, 1.442695
        %v2225 = vpow.pop %v2224
        %v2226 = vmul.f32 %v2191, 1.442695
        %v2227 = vpow.pop %v2226
        %v2228 = vmul.f32 %v2192, 1.442695
        %v2229 = vpow.pop %v2228
        %v2230 = vmul.f32 %v2193, 1.442695
        %v2231 = vpow.pop %v2230
        %v2232 = vmul.f32 %v2194, 1.442695
        %v2233 = vpow.pop %v2232
        %v2234 = vmul.f32 %v2195, 1.442695
        %v2235 = vpow.pop %v2234
        %v2236 = vmul.f32 %v2196, 1.442695
        %v2237 = vpow.pop %v2236
        %v2238 = vmul.f32 %v2197, 1.442695
        %v2239 = vpow.pop %v2238
        %v2240 = vmul.f32 %v2198, 1.442695
        %v2241 = vpow.pop %v2240
        %v2242 = vmul.f32 %v2199, 1.442695
        %v2243 = vpow.pop %v2242
        %v2244 = vmul.f32 %v2200, 1.442695
        %v2245 = vpow.pop %v2244
        %v2246 = vmul.f32 %v2201, 1.442695
        %v2247 = vpow.pop %v2246
        %v2248 = vmul.f32 %v2202, 1.442695
        %v2249 = vpow.pop %v2248
        %v2250 = vmul.f32 %v2203, 1.442695
        %v2251 = vpow.pop %v2250
        %v2252 = vmul.f32 %v2204, 1.442695
        %v2253 = vpow.pop %v2252
        %v2254 = vmul.f32 %v2205, 1.442695
        %v2255 = vpow.pop %v2254
        %v2256 = vmul.f32 %v2206, 1.442695
        %v2257 = vpow.pop %v2256
        %v2258 = vmul.f32 %v2207, 1.442695
        %v2259 = vpow.pop %v2258
        %v2260 = vmul.f32 %v2208, 1.442695
        %v2261 = vpow.pop %v2260
        %v2262 = vmul.f32 %v2209, 1.442695
        %v2263 = vpow.pop %v2262
        %v2264 = vmul.f32 %v2210, 1.442695
        %v2265 = vpow.pop %v2264
        %v2266 = vmul.f32 %v2211, 1.442695
        %v2267 = vpow.pop %v2266
        %v2268 = vmul.f32 %v2212, 1.442695
        %v2269 = vpow.pop %v2268
        %v2270 = vmul.f32 %v2213, 1.442695
        %v2271 = vpow.pop %v2270
        %v2272 = vmul.f32 %v2214, 1.442695
        %v2273 = vpow.pop %v2272
        %v2274 = vmul.f32 %v2215, 1.442695
        %v2275 = vpow.pop %v2274
        %v2276 = vmul.f32 %v2216, 1.442695
        %v2277 = vpow.pop %v2276
        %v2278 = vmul.f32 %v2217, 1.442695
        %v2279 = vpow.pop %v2278
        %v2280 = vmul.f32 %v2218, 1.442695
        %v2281 = vpow.pop %v2280
        %v2282 = vmul.f32 %v2219, 1.442695
        %v2283 = vpow.pop %v2282
        %v2284 = vadd.f32 %v2221, 1.0
        %v2285 = vadd.f32 %v2223, 1.0
        %v2286 = vadd.f32 %v2225, 1.0
        %v2287 = vadd.f32 %v2227, 1.0
        %v2288 = vadd.f32 %v2229, 1.0
        %v2289 = vadd.f32 %v2231, 1.0
        %v2290 = vadd.f32 %v2233, 1.0
        %v2291 = vadd.f32 %v2235, 1.0
        %v2292 = vadd.f32 %v2237, 1.0
        %v2293 = vadd.f32 %v2239, 1.0
        %v2294 = vadd.f32 %v2241, 1.0
        %v2295 = vadd.f32 %v2243, 1.0
        %v2296 = vadd.f32 %v2245, 1.0
        %v2297 = vadd.f32 %v2247, 1.0
        %v2298 = vadd.f32 %v2249, 1.0
        %v2299 = vadd.f32 %v2251, 1.0
        %v2300 = vadd.f32 %v2253, 1.0
        %v2301 = vadd.f32 %v2255, 1.0
        %v2302 = vadd.f32 %v2257, 1.0
        %v2303 = vadd.f32 %v2259, 1.0
        %v2304 = vadd.f32 %v2261, 1.0
        %v2305 = vadd.f32 %v2263, 1.0
        %v2306 = vadd.f32 %v2265, 1.0
        %v2307 = vadd.f32 %v2267, 1.0
        %v2308 = vadd.f32 %v2269, 1.0
        %v2309 = vadd.f32 %v2271, 1.0
        %v2310 = vadd.f32 %v2273, 1.0
        %v2311 = vadd.f32 %v2275, 1.0
        %v2312 = vadd.f32 %v2277, 1.0
        %v2313 = vadd.f32 %v2279, 1.0
        %v2314 = vadd.f32 %v2281, 1.0
        %v2315 = vadd.f32 %v2283, 1.0
        %v2316 = vmul.f32 %v2284, %v2284
        %v2317 = vmul.f32 %v2285, %v2285
        %v2318 = vmul.f32 %v2286, %v2286
        %v2319 = vmul.f32 %v2287, %v2287
        %v2320 = vmul.f32 %v2288, %v2288
        %v2321 = vmul.f32 %v2289, %v2289
        %v2322 = vmul.f32 %v2290, %v2290
        %v2323 = vmul.f32 %v2291, %v2291
        %v2324 = vmul.f32 %v2292, %v2292
        %v2325 = vmul.f32 %v2293, %v2293
        %v2326 = vmul.f32 %v2294, %v2294
        %v2327 = vmul.f32 %v2295, %v2295
        %v2328 = vmul.f32 %v2296, %v2296
        %v2329 = vmul.f32 %v2297, %v2297
        %v2330 = vmul.f32 %v2298, %v2298
        %v2331 = vmul.f32 %v2299, %v2299
        %v2332 = vmul.f32 %v2300, %v2300
        %v2333 = vmul.f32 %v2301, %v2301
        %v2334 = vmul.f32 %v2302, %v2302
        %v2335 = vmul.f32 %v2303, %v2303
        %v2336 = vmul.f32 %v2304, %v2304
        %v2337 = vmul.f32 %v2305, %v2305
        %v2338 = vmul.f32 %v2306, %v2306
        %v2339 = vmul.f32 %v2307, %v2307
        %v2340 = vmul.f32 %v2308, %v2308
        %v2341 = vmul.f32 %v2309, %v2309
        %v2342 = vmul.f32 %v2310, %v2310
        %v2343 = vmul.f32 %v2311, %v2311
        %v2344 = vmul.f32 %v2312, %v2312
        %v2345 = vmul.f32 %v2313, %v2313
        %v2346 = vmul.f32 %v2314, %v2314
        %v2347 = vmul.f32 %v2315, %v2315
        %v2348 = vadd.f32 %v2316, 1.0
        %v2349 = vadd.f32 %v2317, 1.0
        %v2350 = vadd.f32 %v2318, 1.0
        %v2351 = vadd.f32 %v2319, 1.0
        %v2352 = vadd.f32 %v2320, 1.0
        %v2353 = vadd.f32 %v2321, 1.0
        %v2354 = vadd.f32 %v2322, 1.0
        %v2355 = vadd.f32 %v2323, 1.0
        %v2356 = vadd.f32 %v2324, 1.0
        %v2357 = vadd.f32 %v2325, 1.0
        %v2358 = vadd.f32 %v2326, 1.0
        %v2359 = vadd.f32 %v2327, 1.0
        %v2360 = vadd.f32 %v2328, 1.0
        %v2361 = vadd.f32 %v2329, 1.0
        %v2362 = vadd.f32 %v2330, 1.0
        %v2363 = vadd.f32 %v2331, 1.0
        %v2364 = vadd.f32 %v2332, 1.0
        %v2365 = vadd.f32 %v2333, 1.0
        %v2366 = vadd.f32 %v2334, 1.0
        %v2367 = vadd.f32 %v2335, 1.0
        %v2368 = vadd.f32 %v2336, 1.0
        %v2369 = vadd.f32 %v2337, 1.0
        %v2370 = vadd.f32 %v2338, 1.0
        %v2371 = vadd.f32 %v2339, 1.0
        %v2372 = vadd.f32 %v2340, 1.0
        %v2373 = vadd.f32 %v2341, 1.0
        %v2374 = vadd.f32 %v2342, 1.0
        %v2375 = vadd.f32 %v2343, 1.0
        %v2376 = vadd.f32 %v2344, 1.0
        %v2377 = vadd.f32 %v2345, 1.0
        %v2378 = vadd.f32 %v2346, 1.0
        %v2379 = vadd.f32 %v2347, 1.0
        %v2380 = vrcp.pop %v2348
        %v2381 = vrcp.pop %v2349
        %v2382 = vrcp.pop %v2350
        %v2383 = vrcp.pop %v2351
        %v2384 = vrcp.pop %v2352
        %v2385 = vrcp.pop %v2353
        %v2386 = vrcp.pop %v2354
        %v2387 = vrcp.pop %v2355
        %v2388 = vrcp.pop %v2356
        %v2389 = vrcp.pop %v2357
        %v2390 = vrcp.pop %v2358
        %v2391 = vrcp.pop %v2359
        %v2392 = vrcp.pop %v2360
        %v2393 = vrcp.pop %v2361
        %v2394 = vrcp.pop %v2362
        %v2395 = vrcp.pop %v2363
        %v2396 = vrcp.pop %v2364
        %v2397 = vrcp.pop %v2365
        %v2398 = vrcp.pop %v2366
        %v2399 = vrcp.pop %v2367
        %v2400 = vrcp.pop %v2368
        %v2401 = vrcp.pop %v2369
        %v2402 = vrcp.pop %v2370
        %v2403 = vrcp.pop %v2371
        %v2404 = vrcp.pop %v2372
        %v2405 = vrcp.pop %v2373
        %v2406 = vrcp.pop %v2374
        %v2407 = vrcp.pop %v2375
        %v2408 = vrcp.pop %v2376
        %v2409 = vrcp.pop %v2377
        %v2410 = vrcp.pop %v2378
        %v2411 = vrcp.pop %v2379
        %v2412 = vmul.f32 %v2348, %v2380
        %v2413 = vmul.f32 %v2349, %v2381
        %v2414 = vmul.f32 %v2350, %v2382
        %v2415 = vmul.f32 %v2351, %v2383
        %v2416 = vmul.f32 %v2352, %v2384
        %v2417 = vmul.f32 %v2353, %v2385
        %v2418 = vmul.f32 %v2354, %v2386
        %v2419 = vmul.f32 %v2355, %v2387
        %v2420 = vmul.f32 %v2356, %v2388
        %v2421 = vmul.f32 %v2357, %v2389
        %v2422 = vmul.f32 %v2358, %v2390
        %v2423 = vmul.f32 %v2359, %v2391
        %v2424 = vmul.f32 %v2360, %v2392
        %v2425 = vmul.f32 %v2361, %v2393
        %v2426 = vmul.f32 %v2362, %v2394
        %v2427 = vmul.f32 %v2363, %v2395
        %v2428 = vmul.f32 %v2364, %v2396
        %v2429 = vmul.f32 %v2365, %v2397
        %v2430 = vmul.f32 %v2366, %v2398
        %v2431 = vmul.f32 %v2367, %v2399
        %v2432 = vmul.f32 %v2368, %v2400
        %v2433 = vmul.f32 %v2369, %v2401
        %v2434 = vmul.f32 %v2370, %v2402
        %v2435 = vmul.f32 %v2371, %v2403
        %v2436 = vmul.f32 %v2372, %v2404
        %v2437 = vmul.f32 %v2373, %v2405
        %v2438 = vmul.f32 %v2374, %v2406
        %v2439 = vmul.f32 %v2375, %v2407
        %v2440 = vmul.f32 %v2376, %v2408
        %v2441 = vmul.f32 %v2377, %v2409
        %v2442 = vmul.f32 %v2378, %v2410
        %v2443 = vmul.f32 %v2379, %v2411
        %v2444 = vsub.f32 2.0, %v2412
        %v2445 = vsub.f32 2.0, %v2413
        %v2446 = vsub.f32 2.0, %v2414
        %v2447 = vsub.f32 2.0, %v2415
        %v2448 = vsub.f32 2.0, %v2416
        %v2449 = vsub.f32 2.0, %v2417
        %v2450 = vsub.f32 2.0, %v2418
        %v2451 = vsub.f32 2.0, %v2419
        %v2452 = vsub.f32 2.0, %v2420
        %v2453 = vsub.f32 2.0, %v2421
        %v2454 = vsub.f32 2.0, %v2422
        %v2455 = vsub.f32 2.0, %v2423
        %v2456 = vsub.f32 2.0, %v2424
        %v2457 = vsub.f32 2.0, %v2425
        %v2458 = vsub.f32 2.0, %v2426
        %v2459 = vsub.f32 2.0, %v2427
        %v2460 = vsub.f32 2.0, %v2428
        %v2461 = vsub.f32 2.0, %v2429
        %v2462 = vsub.f32 2.0, %v2430
        %v2463 = vsub.f32 2.0, %v2431
        %v2464 = vsub.f32 2.0, %v2432
        %v2465 = vsub.f32 2.0, %v2433
        %v2466 = vsub.f32 2.0, %v2434
        %v2467 = vsub.f32 2.0, %v2435
        %v2468 = vsub.f32 2.0, %v2436
        %v2469 = vsub.f32 2.0, %v2437
        %v2470 = vsub.f32 2.0, %v2438
        %v2471 = vsub.f32 2.0, %v2439
        %v2472 = vsub.f32 2.0, %v2440
        %v2473 = vsub.f32 2.0, %v2441
        %v2474 = vsub.f32 2.0, %v2442
        %v2475 = vsub.f32 2.0, %v2443
        %v2476 = vmul.f32 %v2380, %v2444
        %v2477 = vmul.f32 %v2381, %v2445
        %v2478 = vmul.f32 %v2382, %v2446
        %v2479 = vmul.f32 %v2383, %v2447
        %v2480 = vmul.f32 %v2384, %v2448
        %v2481 = vmul.f32 %v2385, %v2449
        %v2482 = vmul.f32 %v2386, %v2450
        %v2483 = vmul.f32 %v2387, %v2451
        %v2484 = vmul.f32 %v2388, %v2452
        %v2485 = vmul.f32 %v2389, %v2453
        %v2486 = vmul.f32 %v2390, %v2454
        %v2487 = vmul.f32 %v2391, %v2455
        %v2488 = vmul.f32 %v2392, %v2456
        %v2489 = vmul.f32 %v2393, %v2457
        %v2490 = vmul.f32 %v2394, %v2458
        %v2491 = vmul.f32 %v2395, %v2459
        %v2492 = vmul.f32 %v2396, %v2460
        %v2493 = vmul.f32 %v2397, %v2461
        %v2494 = vmul.f32 %v2398, %v2462
        %v2495 = vmul.f32 %v2399, %v2463
        %v2496 = vmul.f32 %v2400, %v2464
        %v2497 = vmul.f32 %v2401, %v2465
        %v2498 = vmul.f32 %v2402, %v2466
        %v2499 = vmul.f32 %v2403, %v2467
        %v2500 = vmul.f32 %v2404, %v2468
        %v2501 = vmul.f32 %v2405, %v2469
        %v2502 = vmul.f32 %v2406, %v2470
        %v2503 = vmul.f32 %v2407, %v2471
        %v2504 = vmul.f32 %v2408, %v2472
        %v2505 = vmul.f32 %v2409, %v2473
        %v2506 = vmul.f32 %v2410, %v2474
        %v2507 = vmul.f32 %v2411, %v2475
        %v2508 = vsub.f32 %v2316, 1.0
        %v2509 = vsub.f32 %v2317, 1.0
        %v2510 = vsub.f32 %v2318, 1.0
        %v2511 = vsub.f32 %v2319, 1.0
        %v2512 = vsub.f32 %v2320, 1.0
        %v2513 = vsub.f32 %v2321, 1.0
        %v2514 = vsub.f32 %v2322, 1.0
        %v2515 = vsub.f32 %v2323, 1.0
        %v2516 = vsub.f32 %v2324, 1.0
        %v2517 = vsub.f32 %v2325, 1.0
        %v2518 = vsub.f32 %v2326, 1.0
        %v2519 = vsub.f32 %v2327, 1.0
        %v2520 = vsub.f32 %v2328, 1.0
        %v2521 = vsub.f32 %v2329, 1.0
        %v2522 = vsub.f32 %v2330, 1.0
        %v2523 = vsub.f32 %v2331, 1.0
        %v2524 = vsub.f32 %v2332, 1.0
        %v2525 = vsub.f32 %v2333, 1.0
        %v2526 = vsub.f32 %v2334, 1.0
        %v2527 = vsub.f32 %v2335, 1.0
        %v2528 = vsub.f32 %v2336, 1.0
        %v2529 = vsub.f32 %v2337, 1.0
        %v2530 = vsub.f32 %v2338, 1.0
        %v2531 = vsub.f32 %v2339, 1.0
        %v2532 = vsub.f32 %v2340, 1.0
        %v2533 = vsub.f32 %v2341, 1.0
        %v2534 = vsub.f32 %v2342, 1.0
        %v2535 = vsub.f32 %v2343, 1.0
        %v2536 = vsub.f32 %v2344, 1.0
        %v2537 = vsub.f32 %v2345, 1.0
        %v2538 = vsub.f32 %v2346, 1.0
        %v2539 = vsub.f32 %v2347, 1.0
        %v2540 = vmul.f32 %v2030, %v2508
        %v2541 = vmul.f32 %v2035, %v2509
        %v2542 = vmul.f32 %v2040, %v2510
        %v2543 = vmul.f32 %v2045, %v2511
        %v2544 = vmul.f32 %v2050, %v2512
        %v2545 = vmul.f32 %v2055, %v2513
        %v2546 = vmul.f32 %v2060, %v2514
        %v2547 = vmul.f32 %v2065, %v2515
        %v2548 = vmul.f32 %v2070, %v2516
        %v2549 = vmul.f32 %v2075, %v2517
        %v2550 = vmul.f32 %v2080, %v2518
        %v2551 = vmul.f32 %v2085, %v2519
        %v2552 = vmul.f32 %v2090, %v2520
        %v2553 = vmul.f32 %v2095, %v2521
        %v2554 = vmul.f32 %v2100, %v2522
        %v2555 = vmul.f32 %v2105, %v2523
        %v2556 = vmul.f32 %v2110, %v2524
        %v2557 = vmul.f32 %v2115, %v2525
        %v2558 = vmul.f32 %v2120, %v2526
        %v2559 = vmul.f32 %v2125, %v2527
        %v2560 = vmul.f32 %v2130, %v2528
        %v2561 = vmul.f32 %v2135, %v2529
        %v2562 = vmul.f32 %v2140, %v2530
        %v2563 = vmul.f32 %v2145, %v2531
        %v2564 = vmul.f32 %v2150, %v2532
        %v2565 = vmul.f32 %v2155, %v2533
        %v2566 = vmul.f32 %v2160, %v2534
        %v2567 = vmul.f32 %v2165, %v2535
        %v2568 = vmul.f32 %v2170, %v2536
        %v2569 = vmul.f32 %v2175, %v2537
        %v2570 = vmul.f32 %v2180, %v2538
        %v2571 = vmul.f32 %v2185, %v2539
        %v2572 = vmul.f32 %v2540, %v2476
        %v2573 = vmul.f32 %v2541, %v2477
        %v2574 = vmul.f32 %v2542, %v2478
        %v2575 = vmul.f32 %v2543, %v2479
        %v2576 = vmul.f32 %v2544, %v2480
        %v2577 = vmul.f32 %v2545, %v2481
        %v2578 = vmul.f32 %v2546, %v2482
        %v2579 = vmul.f32 %v2547, %v2483
        %v2580 = vmul.f32 %v2548, %v2484
        %v2581 = vmul.f32 %v2549, %v2485
        %v2582 = vmul.f32 %v2550, %v2486
        %v2583 = vmul.f32 %v2551, %v2487
        %v2584 = vmul.f32 %v2552, %v2488
        %v2585 = vmul.f32 %v2553, %v2489
        %v2586 = vmul.f32 %v2554, %v2490
        %v2587 = vmul.f32 %v2555, %v2491
        %v2588 = vmul.f32 %v2556, %v2492
        %v2589 = vmul.f32 %v2557, %v2493
        %v2590 = vmul.f32 %v2558, %v2494
        %v2591 = vmul.f32 %v2559, %v2495
        %v2592 = vmul.f32 %v2560, %v2496
        %v2593 = vmul.f32 %v2561, %v2497
        %v2594 = vmul.f32 %v2562, %v2498
        %v2595 = vmul.f32 %v2563, %v2499
        %v2596 = vmul.f32 %v2564, %v2500
        %v2597 = vmul.f32 %v2565, %v2501
        %v2598 = vmul.f32 %v2566, %v2502
        %v2599 = vmul.f32 %v2567, %v2503
        %v2600 = vmul.f32 %v2568, %v2504
        %v2601 = vmul.f32 %v2569, %v2505
        %v2602 = vmul.f32 %v2570, %v2506
        %v2603 = vmul.f32 %v2571, %v2507
        %vm2604 = vcmp.gt.f32.partialorder %v2030, 20.0
        %vm2605 = vcmp.gt.f32.partialorder %v2035, 20.0
        %vm2606 = vcmp.gt.f32.partialorder %v2040, 20.0
        %vm2607 = vcmp.gt.f32.partialorder %v2045, 20.0
        %vm2608 = vcmp.gt.f32.partialorder %v2050, 20.0
        %vm2609 = vcmp.gt.f32.partialorder %v2055, 20.0
        %vm2610 = vcmp.gt.f32.partialorder %v2060, 20.0
        %vm2611 = vcmp.gt.f32.partialorder %v2065, 20.0
        %vm2612 = vcmp.gt.f32.partialorder %v2070, 20.0
        %vm2613 = vcmp.gt.f32.partialorder %v2075, 20.0
        %vm2614 = vcmp.gt.f32.partialorder %v2080, 20.0
        %vm2615 = vcmp.gt.f32.partialorder %v2085, 20.0
        %vm2616 = vcmp.gt.f32.partialorder %v2090, 20.0
        %vm2617 = vcmp.gt.f32.partialorder %v2095, 20.0
        %vm2618 = vcmp.gt.f32.partialorder %v2100, 20.0
        %vm2619 = vcmp.gt.f32.partialorder %v2105, 20.0
        %vm2620 = vcmp.gt.f32.partialorder %v2110, 20.0
        %vm2621 = vcmp.gt.f32.partialorder %v2115, 20.0
        %vm2622 = vcmp.gt.f32.partialorder %v2120, 20.0
        %vm2623 = vcmp.gt.f32.partialorder %v2125, 20.0
        %vm2624 = vcmp.gt.f32.partialorder %v2130, 20.0
        %vm2625 = vcmp.gt.f32.partialorder %v2135, 20.0
        %vm2626 = vcmp.gt.f32.partialorder %v2140, 20.0
        %vm2627 = vcmp.gt.f32.partialorder %v2145, 20.0
        %vm2628 = vcmp.gt.f32.partialorder %v2150, 20.0
        %vm2629 = vcmp.gt.f32.partialorder %v2155, 20.0
        %vm2630 = vcmp.gt.f32.partialorder %v2160, 20.0
        %vm2631 = vcmp.gt.f32.partialorder %v2165, 20.0
        %vm2632 = vcmp.gt.f32.partialorder %v2170, 20.0
        %vm2633 = vcmp.gt.f32.partialorder %v2175, 20.0
        %vm2634 = vcmp.gt.f32.partialorder %v2180, 20.0
        %vm2635 = vcmp.gt.f32.partialorder %v2185, 20.0
        %v2636 = vsel %vm2604, %v2030, %v2572
        %v2637 = vsel %vm2605, %v2035, %v2573
        %v2638 = vsel %vm2606, %v2040, %v2574
        %v2639 = vsel %vm2607, %v2045, %v2575
        %v2640 = vsel %vm2608, %v2050, %v2576
        %v2641 = vsel %vm2609, %v2055, %v2577
        %v2642 = vsel %vm2610, %v2060, %v2578
        %v2643 = vsel %vm2611, %v2065, %v2579
        %v2644 = vsel %vm2612, %v2070, %v2580
        %v2645 = vsel %vm2613, %v2075, %v2581
        %v2646 = vsel %vm2614, %v2080, %v2582
        %v2647 = vsel %vm2615, %v2085, %v2583
        %v2648 = vsel %vm2616, %v2090, %v2584
        %v2649 = vsel %vm2617, %v2095, %v2585
        %v2650 = vsel %vm2618, %v2100, %v2586
        %v2651 = vsel %vm2619, %v2105, %v2587
        %v2652 = vsel %vm2620, %v2110, %v2588
        %v2653 = vsel %vm2621, %v2115, %v2589
        %v2654 = vsel %vm2622, %v2120, %v2590
        %v2655 = vsel %vm2623, %v2125, %v2591
        %v2656 = vsel %vm2624, %v2130, %v2592
        %v2657 = vsel %vm2625, %v2135, %v2593
        %v2658 = vsel %vm2626, %v2140, %v2594
        %v2659 = vsel %vm2627, %v2145, %v2595
        %v2660 = vsel %vm2628, %v2150, %v2596
        %v2661 = vsel %vm2629, %v2155, %v2597
        %v2662 = vsel %vm2630, %v2160, %v2598
        %v2663 = vsel %vm2631, %v2165, %v2599
        %v2664 = vsel %vm2632, %v2170, %v2600
        %v2665 = vsel %vm2633, %v2175, %v2601
        %v2666 = vsel %vm2634, %v2180, %v2602
        %v2667 = vsel %vm2635, %v2185, %v2603
        %2668 = vst [vmem:[%s186] sm:$0xff] %v2636
        %2669 = vst [vmem:[%s186 + $0x8] sm:$0xff] %v2637
        %2670 = vst [vmem:[%s186 + $0x10] sm:$0xff] %v2638
        %2671 = vst [vmem:[%s186 + $0x18] sm:$0xff] %v2639
        %2672 = vst [vmem:[%s186 + $0x20] sm:$0xff] %v2640
        %2673 = vst [vmem:[%s186 + $0x28] sm:$0xff] %v2641
        %2674 = vst [vmem:[%s186 + $0x30] sm:$0xff] %v2642
        %2675 = vst [vmem:[%s186 + $0x38] sm:$0xff] %v2643
        %2676 = vst [vmem:[%s186 + $0x40] sm:$0xff] %v2644
        %2677 = vst [vmem:[%s186 + $0x48] sm:$0xff] %v2645
        %2678 = vst [vmem:[%s186 + $0x50] sm:$0xff] %v2646
        %2679 = vst [vmem:[%s186 + $0x58] sm:$0xff] %v2647
        %2680 = vst [vmem:[%s186 + $0x60] sm:$0xff] %v2648
        %2681 = vst [vmem:[%s186 + $0x68] sm:$0xff] %v2649
        %2682 = vst [vmem:[%s186 + $0x70] sm:$0xff] %v2650
        %2683 = vst [vmem:[%s186 + $0x78] sm:$0xff] %v2651
        %2684 = vst [vmem:[%s186 + $0x80] sm:$0xff] %v2652
        %2685 = vst [vmem:[%s186 + $0x88] sm:$0xff] %v2653
        %2686 = vst [vmem:[%s186 + $0x90] sm:$0xff] %v2654
        %2687 = vst [vmem:[%s186 + $0x98] sm:$0xff] %v2655
        %2688 = vst [vmem:[%s186 + $0xa0] sm:$0xff] %v2656
        %2689 = vst [vmem:[%s186 + $0xa8] sm:$0xff] %v2657
        %2690 = vst [vmem:[%s186 + $0xb0] sm:$0xff] %v2658
        %2691 = vst [vmem:[%s186 + $0xb8] sm:$0xff] %v2659
        %2692 = vst [vmem:[%s186 + $0xc0] sm:$0xff] %v2660
        %2693 = vst [vmem:[%s186 + $0xc8] sm:$0xff] %v2661
        %2694 = vst [vmem:[%s186 + $0xd0] sm:$0xff] %v2662
        %2695 = vst [vmem:[%s186 + $0xd8] sm:$0xff] %v2663
        %2696 = vst [vmem:[%s186 + $0xe0] sm:$0xff] %v2664
        %2697 = vst [vmem:[%s186 + $0xe8] sm:$0xff] %v2665
        %2698 = vst [vmem:[%s186 + $0xf0] sm:$0xff] %v2666
        %2699 = vst [vmem:[%s186 + $0xf8] sm:$0xff] %v2667
        %s2700 = sand.u32 %s116, 1
        %s2701 = scalar_lea.sflag [#allocation4], %s2700
        %s2702 = sand.u32 %s116, 1
        %s2703 = smul.addr %s2702, 256
        %s2704 = scalar_lea.vmem [#allocation3], %s2703
        // Predicated region
        $region37: #{tpu_custom_call.1} parent=31 // pred_check
          %p2705 = pneg %p126
        $region38: #{tpu_custom_call.1} parent=31 // pred_check_branch
          %2707 = sbr.rel (%p2705) target = $region40
        $region39: #{tpu_custom_call.1} parent=31 // pred_region
          %s2708 = smul.u32 16, %s23
          %s2710 = ssub.s32 4096, 4096
          %2711 = vsyncadd %s2701, %s2710
          %s2712 = smul.addr %s2708, 2
          %s2713 = sadd.s32 %s24, %s2712
          %s2714 = smul.addr %s22, 32
          %s2715 = sadd.s32 %s2713, %s2714
          %s2716 = smul.addr %s2715, 128
          %s2717 = scalar_lea.hbm %s3, %s2716
          %s2718 = sshll.u32 %s2704, 4
          %s2719 = int_to_ptr.vmem [resolvable:$true] %s2718
          %2724 = dma.vmem_to_hbm [thread:$0]  %s2719, 4096, %s2717, %s2701, 128, 128, 8
        $region40: #{tpu_custom_call.1} parent=31 // pred_fallthru
          _
      $region32: #{tpu_custom_call.1} parent=5 // pred_fallthru
        _
      %p2725 = scmp.le.s32.totalorder 2, %s12
      // Predicated region
      $region41: #{tpu_custom_call.1} parent=5 // pred_check
        %p2726 = pneg %p2725
      $region42: #{tpu_custom_call.1} parent=5 // pred_check_branch
        %2728 = sbr.rel (%p2726) target = $region44
      $region43: #{tpu_custom_call.1} parent=5 // pred_region
        %s2729 = ssub.s32 %s12, 2
        // Predicated region
        $region45: #{tpu_custom_call.1} parent=43 // pred_check
          %p2730 = pneg %p132
        $region46: #{tpu_custom_call.1} parent=43 // pred_check_branch
          %2732 = sbr.rel (%p2730) target = $region48
        $region47: #{tpu_custom_call.1} parent=43 // pred_region
          %s2733 = sand.u32 %s117, 1
          %s2734 = scalar_lea.sflag [#allocation4], %s2733
          %s2735 = sand.u32 %s117, 1
          %s2736 = smul.addr %s2735, 256
          %s2737 = scalar_lea.vmem [#allocation3], %s2736
          %2738 = dma.done %s2734, 4096
        $region48: #{tpu_custom_call.1} parent=43 // pred_fallthru
          _
      $region44: #{tpu_custom_call.1} parent=5 // pred_fallthru
        _
    $region6: #{tpu_custom_call.1} parent=1 // loop_footer
      %s16 = sadd.s32 1, %s12
    $region7: #{tpu_custom_call.1} parent=1 // loop_footer_branch
      %11 = sbr.rel target = $region3
    $region8: #{tpu_custom_call.1} parent=1 // loop_exit
      _
    %2739 = vsyncpa [#allocation4], 1
    %s2740 = scalar_lea.sflag [#allocation4], 1
    %2741 = vsyncpa %s2740, 1

</llo_original>
